<compile_context>
chip_gen: v6e
topology: v6e:2x2x1
jax: 0.10.0
libtpu: 0.0.40
codegen_flags: <defaults>
</compile_context>

<pallas_src>
import functools

import jax
import jax.numpy as jnp
from jax import lax
from jax.experimental import pallas as pl
from jax.experimental.pallas import tpu as pltpu


def _self_attn_kernel(heads, head_channels, out_channels,
                      x_ref, xq_ref, wkv_ref, bkv_ref, wq_ref, bq_ref,
                      relT_ref, wu_ref, bu_ref, o_ref):
    """One (query-tile, batch-element) pair per grid step; all heads in-kernel.

    x_ref    : (1, Cin, HW)      full positions (channel-major) -> keys/values
    xq_ref   : (1, Cin, tq)      query-tile positions           -> queries
    wkv_ref  : (2*Cout, Cin)     fused [k | v] 1x1-conv weights
    bkv_ref  : (2*Cout, 1)       fused [k | v] bias
    wq_ref   : (Cout, Cin)       query weights (attention scale pre-folded)
    bq_ref   : (Cout, 1)         query bias (pre-scaled)
    relT_ref : (heads, tq, HW)   relative position bias, QUERY-major slice
    wu_ref   : (Cout, Cout)      unifyheads 1x1-conv weight
    bu_ref   : (Cout, 1)         unifyheads bias
    o_ref    : (1, Cout, tq)     channel-major, lane-dense output tile
    """
    hc = head_channels
    Cout = out_channels

    x = x_ref[0]                                                   # (Cin, HW)
    xq = xq_ref[0]                                                 # (Cin, tq)

    # Keys/values for every position; queries only for this query tile.
    kv = jnp.dot(wkv_ref[...], x,
                 preferred_element_type=jnp.float32) + bkv_ref[...]   # (2*Cout, HW)
    q = jnp.dot(wq_ref[...], xq,
                preferred_element_type=jnp.float32) + bq_ref[...]     # (Cout, tq)

    oh_parts = []
    for g in range(heads):                                         # heads is tiny; unrolled
        q_g = q[g * hc:(g + 1) * hc, :]                            # (hc, tq), pre-scaled
        k_g = kv[g * hc:(g + 1) * hc, :]                           # (hc, HW)
        v_g = kv[Cout + g * hc:Cout + (g + 1) * hc, :]             # (hc, HW)

        # s[j, i] = scale * <q_j, k_i> + rel[i, j]   (query rows, key lanes)
        s = lax.dot_general(q_g, k_g, (((0,), (0,)), ((), ())),
                            preferred_element_type=jnp.float32)    # (tq, HW)
        s = s + relT_ref[g]

        # softmax over the key axis (lanes)
        s = s - jnp.max(s, axis=-1, keepdims=True)
        p = jnp.exp(s)
        inv = pl.reciprocal(jnp.sum(p, axis=-1, keepdims=True), approx=True)
        p = p * inv

        # ohT[c, j] = sum_i v[c, i] * p[j, i]   -> already channel-major
        oh_parts.append(
            lax.dot_general(v_g, p, (((1,), (1,)), ((), ())),
                            preferred_element_type=jnp.float32))   # (hc, tq)

    # Fused unifyheads: one (Cout, Cout) x (Cout, tq) matmul + bias.
    oh_all = jnp.concatenate(oh_parts, axis=0)                     # (Cout, tq)
    o_ref[0] = (jnp.dot(wu_ref[...], oh_all,
                        preferred_element_type=jnp.float32)
                + bu_ref[...])                                     # (Cout, tq)


def get_indices(h, w):
    """Same as SelfAttention2d.get_indices (static)."""
    y = jnp.arange(h)
    x = jnp.arange(w)
    y1, x1, y2, x2 = jnp.meshgrid(y, x, y, x, indexing="ij")
    idx = (y1 - y2 + h - 1) * (2 * w - 1) + x1 - x2 + w - 1
    return idx.reshape(-1)


def self_attention_2d(x_nchw, Wk, bk, Wq, bq, Wv, bv, Wu, bu, rel_pos,
                      heads, head_channels, *, tq=128):
    B, Cin, H, W = x_nchw.shape
    HW = H * W
    hc = head_channels
    Cout = heads * hc
    scale = float(hc) ** (-0.5)

    assert HW % tq == 0, "query tile must divide HW (and be a multiple of 128)"
    n_qt = HW // tq

    # Channel-major input: a pure reshape of NCHW (no transpose anywhere).
    x = x_nchw.reshape(B, Cin, HW).astype(jnp.float32)

    # Fused [k | v] projection; attention scale folded into the q weights/bias.
    wkv = jnp.concatenate([Wk, Wv], axis=0).astype(jnp.float32)          # (2*Cout, Cin)
    bkv = jnp.concatenate([bk, bv]).reshape(2 * Cout, 1).astype(jnp.float32)
    wqs = (Wq * scale).astype(jnp.float32)                               # (Cout, Cin)
    bqs = (bq * scale).reshape(Cout, 1).astype(jnp.float32)

    # Query-major relative position bias (rel^T per head); one-time prep that in
    # a real model would be cached alongside the parameters.
    relT = rel_pos.transpose(0, 2, 1).astype(jnp.float32)                # (heads, HWq, HWk)

    wu = Wu.astype(jnp.float32)                                          # (Cout, Cout)
    bur = bu.reshape(Cout, 1).astype(jnp.float32)                        # (Cout, 1)

    const2 = lambda qt, b: (0, 0)

    # NOTE: per-step VMEM is ~(heads*tq*HW*4)*2 for the relT slice plus a few KiB
    # of weights/activations — far under the scoped-VMEM default at HW=256.  For
    # much larger HW, add pltpu.CompilerParams(vmem_limit_bytes=...), consider
    # pipeline_mode=pl.Buffered(1) on the constant-index weight specs, and cast
    # relT to bf16 (esp. v7x, 64 MiB VMEM).
    out = pl.pallas_call(
        functools.partial(_self_attn_kernel, heads, hc, Cout),
        out_shape=jax.ShapeDtypeStruct((B, Cout, HW), jnp.float32),
        grid_spec=pltpu.PrefetchScalarGridSpec(
            num_scalar_prefetch=0,
            grid=(n_qt, B),
            in_specs=[
                pl.BlockSpec((1, Cin, HW), lambda qt, b: (b, 0, 0)),     # x (K/V, full)
                pl.BlockSpec((1, Cin, tq), lambda qt, b: (b, 0, qt)),    # x (Q tile)
                pl.BlockSpec((2 * Cout, Cin), const2),                   # wkv (resident)
                pl.BlockSpec((2 * Cout, 1), const2),                     # bkv (resident)
                pl.BlockSpec((Cout, Cin), const2),                       # wq  (resident)
                pl.BlockSpec((Cout, 1), const2),                         # bq  (resident)
                pl.BlockSpec((heads, tq, HW), lambda qt, b: (0, qt, 0)), # relT (per tile)
                pl.BlockSpec((Cout, Cout), const2),                      # wu  (resident)
                pl.BlockSpec((Cout, 1), const2),                         # bu  (resident)
            ],
            out_specs=pl.BlockSpec((1, Cout, tq), lambda qt, b: (b, 0, qt)),
        ),
        compiler_params=pltpu.CompilerParams(
            dimension_semantics=("parallel", "parallel")),
    )(x, x, wkv, bkv, wqs, bqs, relT, wu, bur)

    # Output is already channel-major: pure reshape to NCHW (no transpose).
    return out.reshape(B, Cout, H, W)


def reference(x, Wk, bk, Wq, bq, Wv, bv, Wu, bu, rel_pos, heads, hc):
    """Pure-JAX re-implementation of the PyTorch forward (NCHW)."""
    B, Cin, H, W = x.shape
    HW = H * W
    Cout = heads * hc
    scale = float(hc) ** (-0.5)

    def conv1x1(t, Wt, bt):
        return jnp.einsum("oc,bchw->bohw", Wt, t) + bt[None, :, None, None]

    keys = conv1x1(x, Wk, bk).reshape(B, heads, hc, HW)
    values = conv1x1(x, Wv, bv).reshape(B, heads, hc, HW)
    queries = conv1x1(x, Wq, bq).reshape(B, heads, hc, HW)
    att = jnp.einsum("bgci,bgcj->bgij", keys, queries)
    att = att * scale + rel_pos[None]
    att = jax.nn.softmax(att, axis=-2)
    out = jnp.einsum("bgci,bgij->bgcj", values, att)
    out = out.reshape(B, Cout, H, W)
    return conv1x1(out, Wu, bu)


if __name__ == "__main__":
    # Shapes: SelfAttention2d(in_channels=4, out_channels=8, head_channels=4, shape=(16,16))
    B, Cin, H, W = 2, 4, 16, 16
    Cout, hc = 8, 4
    heads = Cout // hc
    HW = H * W

    key = jax.random.PRNGKey(0)
    ks = jax.random.split(key, 10)
    Wk = 0.2 * jax.random.normal(ks[0], (Cout, Cin), jnp.float32)
    bk = 0.1 * jax.random.normal(ks[1], (Cout,), jnp.float32)
    Wq = 0.2 * jax.random.normal(ks[2], (Cout, Cin), jnp.float32)
    bq = 0.1 * jax.random.normal(ks[3], (Cout,), jnp.float32)
    Wv = 0.2 * jax.random.normal(ks[4], (Cout, Cin), jnp.float32)
    bv = 0.1 * jax.random.normal(ks[5], (Cout,), jnp.float32)
    Wu = 0.2 * jax.random.normal(ks[6], (Cout, Cout), jnp.float32)
    bu = 0.1 * jax.random.normal(ks[7], (Cout,), jnp.float32)
    pos_enc = 0.2 * jax.random.normal(
        ks[8], (heads, (2 * H - 1) * (2 * W - 1)), jnp.float32)
    x = jax.random.normal(ks[9], (B, Cin, H, W), jnp.float32)

    # Relative position gather (static indices) done outside the kernel.
    indices = get_indices(H, W)
    rel_pos = pos_enc[:, indices].reshape(heads, HW, HW)   # key-major, as in torch

    out = self_attention_2d(x, Wk, bk, Wq, bq, Wv, bv, Wu, bu, rel_pos,
                            heads, hc)
    out = jax.block_until_ready(out)

    ref = reference(x, Wk, bk, Wq, bq, Wv, bv, Wu, bu, rel_pos, heads, hc)
    assert out.shape == (B, Cout, H, W)
    max_err = float(jnp.max(jnp.abs(out - ref)))
    if max_err < 1e-3:
        print("KERNEL_OK")
    else:
        print(f"MISMATCH max_abs_err={max_err}")
</pallas_src>

<mosaic_0001>
module attributes {stable_mosaic.version = 11 : i64} {
  func.func @_self_attn_kernel(%arg0: i32, %arg1: i32, %arg2: memref<1x4x256xf32, #tpu.memory_space<vmem>>, %arg3: memref<1x4x128xf32, #tpu.memory_space<vmem>>, %arg4: memref<16x4xf32, #tpu.memory_space<vmem>>, %arg5: memref<16x1xf32, #tpu.memory_space<vmem>>, %arg6: memref<8x4xf32, #tpu.memory_space<vmem>>, %arg7: memref<8x1xf32, #tpu.memory_space<vmem>>, %arg8: memref<2x128x256xf32, #tpu.memory_space<vmem>>, %arg9: memref<8x8xf32, #tpu.memory_space<vmem>>, %arg10: memref<8x1xf32, #tpu.memory_space<vmem>>, %arg11: memref<1x8x128xf32, #tpu.memory_space<vmem>>) attributes {dimension_semantics = [#tpu.dimension_semantics<parallel>, #tpu.dimension_semantics<parallel>], iteration_bounds = array<i64: 2, 2>, scalar_prefetch = 0 : i64, scratch_operands = 0 : i64, tpu.core_type = #tpu.core_type<tc>, window_params = [{transform_indices = @transform_0, window_bounds = array<i64: 1, 4, 256>}, {transform_indices = @transform_1, window_bounds = array<i64: 1, 4, 128>}, {pipeline_mode = #tpu.pipeline_mode<synchronous>, transform_indices = @transform_2, window_bounds = array<i64: 16, 4>}, {pipeline_mode = #tpu.pipeline_mode<synchronous>, transform_indices = @transform_3, window_bounds = array<i64: 16, 1>}, {pipeline_mode = #tpu.pipeline_mode<synchronous>, transform_indices = @transform_4, window_bounds = array<i64: 8, 4>}, {pipeline_mode = #tpu.pipeline_mode<synchronous>, transform_indices = @transform_5, window_bounds = array<i64: 8, 1>}, {transform_indices = @transform_6, window_bounds = array<i64: 2, 128, 256>}, {pipeline_mode = #tpu.pipeline_mode<synchronous>, transform_indices = @transform_7, window_bounds = array<i64: 8, 8>}, {pipeline_mode = #tpu.pipeline_mode<synchronous>, transform_indices = @transform_8, window_bounds = array<i64: 8, 1>}, {transform_indices = @transform_9, window_bounds = array<i64: 1, 8, 128>}]} {
    %c0 = arith.constant 0 : index
    %c0_0 = arith.constant 0 : index
    %c0_1 = arith.constant 0 : index
    %0 = vector.load %arg2[%c0, %c0_0, %c0_1] : memref<1x4x256xf32, #tpu.memory_space<vmem>>, vector<1x4x256xf32>
    %1 = vector.shape_cast %0 : vector<1x4x256xf32> to vector<4x256xf32>
    %c0_2 = arith.constant 0 : index
    %c0_3 = arith.constant 0 : index
    %c0_4 = arith.constant 0 : index
    %2 = vector.load %arg3[%c0_2, %c0_3, %c0_4] : memref<1x4x128xf32, #tpu.memory_space<vmem>>, vector<1x4x128xf32>
    %3 = vector.shape_cast %2 : vector<1x4x128xf32> to vector<4x128xf32>
    %c0_5 = arith.constant 0 : index
    %c0_6 = arith.constant 0 : index
    %4 = vector.load %arg4[%c0_5, %c0_6] : memref<16x4xf32, #tpu.memory_space<vmem>>, vector<16x4xf32>
    %cst = arith.constant dense<0.000000e+00> : vector<16x256xf32>
    %5 = tpu.matmul %4, %1, %cst {dimension_numbers = #tpu.dot_dimension_numbers<[1], [0], [0], [1], [0, 0, 1, 1], [], []>} : vector<16x4xf32>, vector<4x256xf32>, vector<16x256xf32> -> vector<16x256xf32>
    %c0_7 = arith.constant 0 : index
    %c0_8 = arith.constant 0 : index
    %6 = vector.load %arg5[%c0_7, %c0_8] : memref<16x1xf32, #tpu.memory_space<vmem>>, vector<16x1xf32>
    %7 = vector.broadcast %6 : vector<16x1xf32> to vector<16x256xf32>
    %8 = arith.addf %5, %7 : vector<16x256xf32>
    %c0_9 = arith.constant 0 : index
    %c0_10 = arith.constant 0 : index
    %9 = vector.load %arg6[%c0_9, %c0_10] : memref<8x4xf32, #tpu.memory_space<vmem>>, vector<8x4xf32>
    %cst_11 = arith.constant dense<0.000000e+00> : vector<8x128xf32>
    %10 = tpu.matmul %9, %3, %cst_11 {dimension_numbers = #tpu.dot_dimension_numbers<[1], [0], [0], [1], [0, 0, 1, 1], [], []>} : vector<8x4xf32>, vector<4x128xf32>, vector<8x128xf32> -> vector<8x128xf32>
    %c0_12 = arith.constant 0 : index
    %c0_13 = arith.constant 0 : index
    %11 = vector.load %arg7[%c0_12, %c0_13] : memref<8x1xf32, #tpu.memory_space<vmem>>, vector<8x1xf32>
    %12 = vector.broadcast %11 : vector<8x1xf32> to vector<8x128xf32>
    %13 = arith.addf %10, %12 : vector<8x128xf32>
    %14 = vector.extract_strided_slice %13 {offsets = [0, 0], sizes = [4, 128], strides = [1, 1]} : vector<8x128xf32> to vector<4x128xf32>
    %15 = vector.extract_strided_slice %8 {offsets = [0, 0], sizes = [4, 256], strides = [1, 1]} : vector<16x256xf32> to vector<4x256xf32>
    %16 = vector.extract_strided_slice %8 {offsets = [8, 0], sizes = [4, 256], strides = [1, 1]} : vector<16x256xf32> to vector<4x256xf32>
    %cst_14 = arith.constant dense<0.000000e+00> : vector<128x256xf32>
    %17 = tpu.matmul %14, %15, %cst_14 {dimension_numbers = #tpu.dot_dimension_numbers<[0], [0], [1], [1], [0, 1, 1, 1], [], []>} : vector<4x128xf32>, vector<4x256xf32>, vector<128x256xf32> -> vector<128x256xf32>
    %c0_15 = arith.constant 0 : index
    %c0_16 = arith.constant 0 : index
    %c0_17 = arith.constant 0 : index
    %18 = vector.load %arg8[%c0_15, %c0_16, %c0_17] : memref<2x128x256xf32, #tpu.memory_space<vmem>>, vector<1x128x256xf32>
    %19 = vector.shape_cast %18 : vector<1x128x256xf32> to vector<128x256xf32>
    %20 = arith.addf %17, %19 : vector<128x256xf32>
    %cst_18 = arith.constant dense<0xFF800000> : vector<128xf32>
    %21 = vector.multi_reduction <maximumf>, %20, %cst_18 [1] : vector<128x256xf32> to vector<128xf32>
    %22 = vector.shape_cast %21 : vector<128xf32> to vector<128x1xf32>
    %23 = vector.broadcast %22 : vector<128x1xf32> to vector<128x256xf32>
    %24 = arith.subf %20, %23 : vector<128x256xf32>
    %25 = math.exp %24 : vector<128x256xf32>
    %cst_19 = arith.constant dense<0.000000e+00> : vector<128xf32>
    %26 = vector.multi_reduction <add>, %25, %cst_19 [1] : vector<128x256xf32> to vector<128xf32>
    %27 = vector.shape_cast %26 : vector<128xf32> to vector<128x1xf32>
    %28 = tpu.reciprocal %27 {approx = true} : vector<128x1xf32> -> vector<128x1xf32>
    %29 = vector.broadcast %28 : vector<128x1xf32> to vector<128x256xf32>
    %30 = arith.mulf %25, %29 : vector<128x256xf32>
    %cst_20 = arith.constant dense<0.000000e+00> : vector<4x128xf32>
    %31 = tpu.matmul %16, %30, %cst_20 {dimension_numbers = #tpu.dot_dimension_numbers<[1], [1], [0], [0], [0, 0, 1, 0], [], []>} : vector<4x256xf32>, vector<128x256xf32>, vector<4x128xf32> -> vector<4x128xf32>
    %32 = vector.extract_strided_slice %13 {offsets = [4, 0], sizes = [4, 128], strides = [1, 1]} : vector<8x128xf32> to vector<4x128xf32>
    %33 = vector.extract_strided_slice %8 {offsets = [4, 0], sizes = [4, 256], strides = [1, 1]} : vector<16x256xf32> to vector<4x256xf32>
    %34 = vector.extract_strided_slice %8 {offsets = [12, 0], sizes = [4, 256], strides = [1, 1]} : vector<16x256xf32> to vector<4x256xf32>
    %cst_21 = arith.constant dense<0.000000e+00> : vector<128x256xf32>
    %35 = tpu.matmul %32, %33, %cst_21 {dimension_numbers = #tpu.dot_dimension_numbers<[0], [0], [1], [1], [0, 1, 1, 1], [], []>} : vector<4x128xf32>, vector<4x256xf32>, vector<128x256xf32> -> vector<128x256xf32>
    %c1 = arith.constant 1 : index
    %c0_22 = arith.constant 0 : index
    %c0_23 = arith.constant 0 : index
    %36 = vector.load %arg8[%c1, %c0_22, %c0_23] : memref<2x128x256xf32, #tpu.memory_space<vmem>>, vector<1x128x256xf32>
    %37 = vector.shape_cast %36 : vector<1x128x256xf32> to vector<128x256xf32>
    %38 = arith.addf %35, %37 : vector<128x256xf32>
    %cst_24 = arith.constant dense<0xFF800000> : vector<128xf32>
    %39 = vector.multi_reduction <maximumf>, %38, %cst_24 [1] : vector<128x256xf32> to vector<128xf32>
    %40 = vector.shape_cast %39 : vector<128xf32> to vector<128x1xf32>
    %41 = vector.broadcast %40 : vector<128x1xf32> to vector<128x256xf32>
    %42 = arith.subf %38, %41 : vector<128x256xf32>
    %43 = math.exp %42 : vector<128x256xf32>
    %cst_25 = arith.constant dense<0.000000e+00> : vector<128xf32>
    %44 = vector.multi_reduction <add>, %43, %cst_25 [1] : vector<128x256xf32> to vector<128xf32>
    %45 = vector.shape_cast %44 : vector<128xf32> to vector<128x1xf32>
    %46 = tpu.reciprocal %45 {approx = true} : vector<128x1xf32> -> vector<128x1xf32>
    %47 = vector.broadcast %46 : vector<128x1xf32> to vector<128x256xf32>
    %48 = arith.mulf %43, %47 : vector<128x256xf32>
    %cst_26 = arith.constant dense<0.000000e+00> : vector<4x128xf32>
    %49 = tpu.matmul %34, %48, %cst_26 {dimension_numbers = #tpu.dot_dimension_numbers<[1], [1], [0], [0], [0, 0, 1, 0], [], []>} : vector<4x256xf32>, vector<128x256xf32>, vector<4x128xf32> -> vector<4x128xf32>
    %50 = tpu.concatenate %31, %49 in 0 : vector<4x128xf32>, vector<4x128xf32> -> vector<8x128xf32>
    %c0_27 = arith.constant 0 : index
    %c0_28 = arith.constant 0 : index
    %51 = vector.load %arg9[%c0_27, %c0_28] : memref<8x8xf32, #tpu.memory_space<vmem>>, vector<8x8xf32>
    %cst_29 = arith.constant dense<0.000000e+00> : vector<8x128xf32>
    %52 = tpu.matmul %51, %50, %cst_29 {dimension_numbers = #tpu.dot_dimension_numbers<[1], [0], [0], [1], [0, 0, 1, 1], [], []>} : vector<8x8xf32>, vector<8x128xf32>, vector<8x128xf32> -> vector<8x128xf32>
    %c0_30 = arith.constant 0 : index
    %c0_31 = arith.constant 0 : index
    %53 = vector.load %arg10[%c0_30, %c0_31] : memref<8x1xf32, #tpu.memory_space<vmem>>, vector<8x1xf32>
    %54 = vector.broadcast %53 : vector<8x1xf32> to vector<8x128xf32>
    %55 = arith.addf %52, %54 : vector<8x128xf32>
    %c0_32 = arith.constant 0 : index
    %c0_33 = arith.constant 0 : index
    %c0_34 = arith.constant 0 : index
    %56 = vector.load %arg11[%c0_32, %c0_33, %c0_34] : memref<1x8x128xf32, #tpu.memory_space<vmem>>, vector<1x8x128xf32>
    %57 = vector.shape_cast %56 : vector<1x8x128xf32> to vector<8x128xf32>
    %58 = vector.shape_cast %55 : vector<8x128xf32> to vector<1x8x128xf32>
    tpu.vector_store %arg11[%c0_32, %c0_33, %c0_34], %58 {strides = array<i32>} : memref<1x8x128xf32, #tpu.memory_space<vmem>>, vector<1x8x128xf32>,
    return
  }
  func.func @transform_0(%arg0: i32, %arg1: i32) -> (i32, i32, i32) {
    %c0_i32 = arith.constant 0 : i32
    %c0_i32_0 = arith.constant 0 : i32
    %c0_i32_1 = arith.constant 0 : i32
    return %arg1, %c0_i32, %c0_i32_0 : i32, i32, i32
  }
  func.func @transform_1(%arg0: i32, %arg1: i32) -> (i32, i32, i32) {
    %c0_i32 = arith.constant 0 : i32
    %c0_i32_0 = arith.constant 0 : i32
    return %arg1, %c0_i32, %arg0 : i32, i32, i32
  }
  func.func @transform_2(%arg0: i32, %arg1: i32) -> (i32, i32) {
    %c0_i32 = arith.constant 0 : i32
    %c0_i32_0 = arith.constant 0 : i32
    %c0_i32_1 = arith.constant 0 : i32
    return %c0_i32, %c0_i32_0 : i32, i32
  }
  func.func @transform_3(%arg0: i32, %arg1: i32) -> (i32, i32) {
    %c0_i32 = arith.constant 0 : i32
    %c0_i32_0 = arith.constant 0 : i32
    %c0_i32_1 = arith.constant 0 : i32
    return %c0_i32, %c0_i32_0 : i32, i32
  }
  func.func @transform_4(%arg0: i32, %arg1: i32) -> (i32, i32) {
    %c0_i32 = arith.constant 0 : i32
    %c0_i32_0 = arith.constant 0 : i32
    %c0_i32_1 = arith.constant 0 : i32
    return %c0_i32, %c0_i32_0 : i32, i32
  }
  func.func @transform_5(%arg0: i32, %arg1: i32) -> (i32, i32) {
    %c0_i32 = arith.constant 0 : i32
    %c0_i32_0 = arith.constant 0 : i32
    %c0_i32_1 = arith.constant 0 : i32
    return %c0_i32, %c0_i32_0 : i32, i32
  }
  func.func @transform_6(%arg0: i32, %arg1: i32) -> (i32, i32, i32) {
    %c0_i32 = arith.constant 0 : i32
    %c0_i32_0 = arith.constant 0 : i32
    %c0_i32_1 = arith.constant 0 : i32
    return %c0_i32, %arg0, %c0_i32_0 : i32, i32, i32
  }
  func.func @transform_7(%arg0: i32, %arg1: i32) -> (i32, i32) {
    %c0_i32 = arith.constant 0 : i32
    %c0_i32_0 = arith.constant 0 : i32
    %c0_i32_1 = arith.constant 0 : i32
    return %c0_i32, %c0_i32_0 : i32, i32
  }
  func.func @transform_8(%arg0: i32, %arg1: i32) -> (i32, i32) {
    %c0_i32 = arith.constant 0 : i32
    %c0_i32_0 = arith.constant 0 : i32
    %c0_i32_1 = arith.constant 0 : i32
    return %c0_i32, %c0_i32_0 : i32, i32
  }
  func.func @transform_9(%arg0: i32, %arg1: i32) -> (i32, i32, i32) {
    %c0_i32 = arith.constant 0 : i32
    %c0_i32_0 = arith.constant 0 : i32
    return %arg1, %c0_i32, %arg0 : i32, i32, i32
  }
}

</mosaic_0001>

<llo_original>
// kernel: tpu_custom_call.1
$region0: #{tpu_custom_call.1}
  #allocation0 [shape = 'u32[]', space=smem, size = 0x4, offset = 0x4, fixed_abs, tag = 'smem constant byte address 0x4 - core index']
  #allocation1 [shape = 'u32[144,128]{1,0:T(1,128)}', space=vmem, size = 0x12000, scoped, tag = 'internal scratch']
  #allocation6 [shape = 's32[]', space=sflag, size = 0x4, offset = 0, fixed_abs, tag = 'sflag constant byte address 0x0 - dummy sync flag']
  %s0 = inlined_call_operand.vmem [shape: f32[2,4,256], index: 0, kind: input, shape index: {}]
  %s1 = inlined_call_operand.vmem [shape: f32[2,4,256], index: 1, kind: input, shape index: {}]
  %s2 = inlined_call_operand.vmem [shape: f32[16,4], index: 2, kind: input, shape index: {}]
  %s3 = inlined_call_operand.vmem [shape: f32[16,1], index: 3, kind: input, shape index: {}]
  %s4 = inlined_call_operand.vmem [shape: f32[8,4], index: 4, kind: input, shape index: {}]
  %s5 = inlined_call_operand.vmem [shape: f32[8,1], index: 5, kind: input, shape index: {}]
  %s6 = inlined_call_operand.hbm [shape: f32[2,256,256], index: 6, kind: input, shape index: {}]
  %s7 = inlined_call_operand.vmem [shape: f32[8,8], index: 7, kind: input, shape index: {}]
  %s8 = inlined_call_operand.vmem [shape: f32[8,1], index: 8, kind: input, shape index: {}]
  %s9 = inlined_call_operand.hbm [shape: f32[2,8,256], index: 9, kind: output, shape index: {}]
  %s10 = sld [smem:[#allocation0]]
  $region73: #{tpu_custom_call.1} parent=0
    _
  %s12 = ssub.s32 1, %s10
  %s13 = scalar_select 0, %s12, %s10
  $region1: #{tpu_custom_call.1} parent=0
    #allocation2 [shape = 'u8[524288]{0}', space=vmem, size = 0x80000, scoped, tag = 'input window, operand 6']
    #allocation3 [shape = 's32[2]{0}', space=sflag, size = 0x8, scoped, tag = 'scoped memory for tpu_custom_call.1']
    #allocation4 [shape = 's32[2]{0}', space=sflag, size = 0x8, scoped, tag = 'scoped memory for tpu_custom_call.1']
    #allocation5 [shape = 'u8[8192]{0}', space=vmem, size = 0x2000, scoped, tag = 'output window, operand 0']
    %14 = vsyncpa [#allocation3], 0
    %s15 = scalar_lea.sflag [#allocation3], 1
    %16 = vsyncpa %s15, 0
    %17 = vsyncpa [#allocation4], 0
    %s18 = scalar_lea.sflag [#allocation4], 1
    %19 = vsyncpa %s18, 0
    loop: start=0, step=1, limit=6
    $region2: #{tpu_custom_call.1} parent=1 // loop_pre_header
      _
    $region3: #{tpu_custom_call.1} parent=1 // loop_header
      %s21 = sphi 0, %s25
      %p22 = scmp.ge.s32.totalorder %s21, 6
      %s28 = sphi 0, %s40
      %s29 = sphi 0, %s36
      %s30 = sphi 0, %s28
      %s31 = sphi 0, %s29
      %s32 = sphi 0, %s30
      %s33 = sphi 0, %s31
      %s43 = sphi 0, %s45
      %s46 = sphi 0, %s43
      %s47 = sphi 0, %s46
      %s63 = sphi 0, %s47
      %s71 = sphi 0, %s73
      %s74 = sphi 0, %s71
      %s75 = sphi 0, %s74
      %s91 = sphi 0, %s75
      %s95 = sphi 0, %s95
      %s97 = sphi 0, %s95
      %s98 = sphi 0, %s97
      %s112 = sphi 0, %s98
      %s116 = sphi 0, %s116
      %s118 = sphi 0, %s116
      %s119 = sphi 0, %s118
      %s133 = sphi 0, %s119
      %s137 = sphi 0, %s137
      %s139 = sphi 0, %s137
      %s140 = sphi 0, %s139
      %s154 = sphi 0, %s140
      %s158 = sphi 0, %s158
      %s160 = sphi 0, %s158
      %s161 = sphi 0, %s160
      %s175 = sphi 0, %s161
      %s181 = sphi 0, %s183
      %s184 = sphi 0, %s181
      %s185 = sphi 0, %s184
      %s201 = sphi 0, %s185
      %s205 = sphi 0, %s205
      %s207 = sphi 0, %s205
      %s208 = sphi 0, %s207
      %s222 = sphi 0, %s208
      %s226 = sphi 0, %s226
      %s228 = sphi 0, %s226
      %s229 = sphi 0, %s228
      %s243 = sphi 0, %s229
      %s251 = sphi 0, %s253
      %s254 = sphi 0, %s251
      %s255 = sphi 0, %s254
      %s271 = sphi 0, %s255
    $region4: #{tpu_custom_call.1} parent=1 // loop_header_branch
      %24 = sbr.rel (%p22) target = $region8
    $region5: #{tpu_custom_call.1} parent=1 // loop_body
      %s26 = ssub.s32 %s21, 1
      %s27 = ssub.s32 %s21, 2
      %s34 = sadd.s32 1, %s29
      %p35 = scmp.ge.s32.totalorder %s34, 2
      %s36 = scalar_select %p35, 0, %s34
      %s37 = sadd.s32 1, %s28
      %s38 = scalar_select %p35, %s37, %s28
      %p39 = scmp.ge.s32.totalorder %s38, 2
      %s40 = scalar_select %p39, 0, %s38
      %s41 = ssub.s32 %s29, %s36
      %p42 = scmp.eq.s32.totalorder %s41, 0
      %s44 = sadd.s32 %s43, 1
      %s45 = scalar_select %p42, %s43, %s44
      %p48 = pneg %p42
      %p49 = scmp.eq.s32.totalorder %s21, 3
      %p50 = por %p48, %p49
      %p51 = scmp.ne.s32.totalorder %s43, %s46
      %p52 = scmp.eq.s32.totalorder %s21, 0
      %p53 = por %p51, %p52
      %p54 = scmp.ne.s32.totalorder %s43, %s46
      %p55 = scmp.eq.s32.totalorder %s26, 3
      %p56 = por %p54, %p55
      %p57 = scmp.ne.s32.totalorder %s46, %s47
      %p58 = scmp.eq.s32.totalorder %s26, 0
      %p59 = por %p57, %p58
      %p60 = scmp.ne.s32.totalorder %s46, %s47
      %p61 = scmp.eq.s32.totalorder %s27, 3
      %p62 = por %p60, %p61
      %p64 = scmp.ne.s32.totalorder %s47, %s63
      %p65 = scmp.eq.s32.totalorder %s27, 0
      %p66 = por %p64, %p65
      %s67 = ssub.s32 %s29, %s36
      %s68 = ssub.s32 %s28, %s40
      %s69 = sor.u32 %s67, %s68
      %p70 = scmp.eq.s32.totalorder %s69, 0
      %s72 = sadd.s32 %s71, 1
      %s73 = scalar_select %p70, %s71, %s72
      %p76 = pneg %p70
      %p77 = scmp.eq.s32.totalorder %s21, 3
      %p78 = por %p76, %p77
      %p79 = scmp.ne.s32.totalorder %s71, %s74
      %p80 = scmp.eq.s32.totalorder %s21, 0
      %p81 = por %p79, %p80
      %p82 = scmp.ne.s32.totalorder %s71, %s74
      %p83 = scmp.eq.s32.totalorder %s26, 3
      %p84 = por %p82, %p83
      %p85 = scmp.ne.s32.totalorder %s74, %s75
      %p86 = scmp.eq.s32.totalorder %s26, 0
      %p87 = por %p85, %p86
      %p88 = scmp.ne.s32.totalorder %s74, %s75
      %p89 = scmp.eq.s32.totalorder %s27, 3
      %p90 = por %p88, %p89
      %p92 = scmp.ne.s32.totalorder %s75, %s91
      %p93 = scmp.eq.s32.totalorder %s27, 0
      %p94 = por %p92, %p93
      %s96 = sadd.s32 %s95, 1
      %p99 = scmp.eq.s32.totalorder %s21, 3
      %p100 = scmp.ne.s32.totalorder %s95, %s97
      %p101 = scmp.eq.s32.totalorder %s21, 0
      %p102 = por %p100, %p101
      %p103 = scmp.ne.s32.totalorder %s95, %s97
      %p104 = scmp.eq.s32.totalorder %s26, 3
      %p105 = por %p103, %p104
      %p106 = scmp.ne.s32.totalorder %s97, %s98
      %p107 = scmp.eq.s32.totalorder %s26, 0
      %p108 = por %p106, %p107
      %p109 = scmp.ne.s32.totalorder %s97, %s98
      %p110 = scmp.eq.s32.totalorder %s27, 3
      %p111 = por %p109, %p110
      %p113 = scmp.ne.s32.totalorder %s98, %s112
      %p114 = scmp.eq.s32.totalorder %s27, 0
      %p115 = por %p113, %p114
      %s117 = sadd.s32 %s116, 1
      %p120 = scmp.eq.s32.totalorder %s21, 3
      %p121 = scmp.ne.s32.totalorder %s116, %s118
      %p122 = scmp.eq.s32.totalorder %s21, 0
      %p123 = por %p121, %p122
      %p124 = scmp.ne.s32.totalorder %s116, %s118
      %p125 = scmp.eq.s32.totalorder %s26, 3
      %p126 = por %p124, %p125
      %p127 = scmp.ne.s32.totalorder %s118, %s119
      %p128 = scmp.eq.s32.totalorder %s26, 0
      %p129 = por %p127, %p128
      %p130 = scmp.ne.s32.totalorder %s118, %s119
      %p131 = scmp.eq.s32.totalorder %s27, 3
      %p132 = por %p130, %p131
      %p134 = scmp.ne.s32.totalorder %s119, %s133
      %p135 = scmp.eq.s32.totalorder %s27, 0
      %p136 = por %p134, %p135
      %s138 = sadd.s32 %s137, 1
      %p141 = scmp.eq.s32.totalorder %s21, 3
      %p142 = scmp.ne.s32.totalorder %s137, %s139
      %p143 = scmp.eq.s32.totalorder %s21, 0
      %p144 = por %p142, %p143
      %p145 = scmp.ne.s32.totalorder %s137, %s139
      %p146 = scmp.eq.s32.totalorder %s26, 3
      %p147 = por %p145, %p146
      %p148 = scmp.ne.s32.totalorder %s139, %s140
      %p149 = scmp.eq.s32.totalorder %s26, 0
      %p150 = por %p148, %p149
      %p151 = scmp.ne.s32.totalorder %s139, %s140
      %p152 = scmp.eq.s32.totalorder %s27, 3
      %p153 = por %p151, %p152
      %p155 = scmp.ne.s32.totalorder %s140, %s154
      %p156 = scmp.eq.s32.totalorder %s27, 0
      %p157 = por %p155, %p156
      %s159 = sadd.s32 %s158, 1
      %p162 = scmp.eq.s32.totalorder %s21, 3
      %p163 = scmp.ne.s32.totalorder %s158, %s160
      %p164 = scmp.eq.s32.totalorder %s21, 0
      %p165 = por %p163, %p164
      %p166 = scmp.ne.s32.totalorder %s158, %s160
      %p167 = scmp.eq.s32.totalorder %s26, 3
      %p168 = por %p166, %p167
      %p169 = scmp.ne.s32.totalorder %s160, %s161
      %p170 = scmp.eq.s32.totalorder %s26, 0
      %p171 = por %p169, %p170
      %p172 = scmp.ne.s32.totalorder %s160, %s161
      %p173 = scmp.eq.s32.totalorder %s27, 3
      %p174 = por %p172, %p173
      %p176 = scmp.ne.s32.totalorder %s161, %s175
      %p177 = scmp.eq.s32.totalorder %s27, 0
      %p178 = por %p176, %p177
      %s179 = ssub.s32 %s28, %s40
      %p180 = scmp.eq.s32.totalorder %s179, 0
      %s182 = sadd.s32 %s181, 1
      %s183 = scalar_select %p180, %s181, %s182
      %p186 = pneg %p180
      %p187 = scmp.eq.s32.totalorder %s21, 3
      %p188 = por %p186, %p187
      %p189 = scmp.ne.s32.totalorder %s181, %s184
      %p190 = scmp.eq.s32.totalorder %s21, 0
      %p191 = por %p189, %p190
      %p192 = scmp.ne.s32.totalorder %s181, %s184
      %p193 = scmp.eq.s32.totalorder %s26, 3
      %p194 = por %p192, %p193
      %p195 = scmp.ne.s32.totalorder %s184, %s185
      %p196 = scmp.eq.s32.totalorder %s26, 0
      %p197 = por %p195, %p196
      %p198 = scmp.ne.s32.totalorder %s184, %s185
      %p199 = scmp.eq.s32.totalorder %s27, 3
      %p200 = por %p198, %p199
      %p202 = scmp.ne.s32.totalorder %s185, %s201
      %p203 = scmp.eq.s32.totalorder %s27, 0
      %p204 = por %p202, %p203
      %s206 = sadd.s32 %s205, 1
      %p209 = scmp.eq.s32.totalorder %s21, 3
      %p210 = scmp.ne.s32.totalorder %s205, %s207
      %p211 = scmp.eq.s32.totalorder %s21, 0
      %p212 = por %p210, %p211
      %p213 = scmp.ne.s32.totalorder %s205, %s207
      %p214 = scmp.eq.s32.totalorder %s26, 3
      %p215 = por %p213, %p214
      %p216 = scmp.ne.s32.totalorder %s207, %s208
      %p217 = scmp.eq.s32.totalorder %s26, 0
      %p218 = por %p216, %p217
      %p219 = scmp.ne.s32.totalorder %s207, %s208
      %p220 = scmp.eq.s32.totalorder %s27, 3
      %p221 = por %p219, %p220
      %p223 = scmp.ne.s32.totalorder %s208, %s222
      %p224 = scmp.eq.s32.totalorder %s27, 0
      %p225 = por %p223, %p224
      %s227 = sadd.s32 %s226, 1
      %p230 = scmp.eq.s32.totalorder %s21, 3
      %p231 = scmp.ne.s32.totalorder %s226, %s228
      %p232 = scmp.eq.s32.totalorder %s21, 0
      %p233 = por %p231, %p232
      %p234 = scmp.ne.s32.totalorder %s226, %s228
      %p235 = scmp.eq.s32.totalorder %s26, 3
      %p236 = por %p234, %p235
      %p237 = scmp.ne.s32.totalorder %s228, %s229
      %p238 = scmp.eq.s32.totalorder %s26, 0
      %p239 = por %p237, %p238
      %p240 = scmp.ne.s32.totalorder %s228, %s229
      %p241 = scmp.eq.s32.totalorder %s27, 3
      %p242 = por %p240, %p241
      %p244 = scmp.ne.s32.totalorder %s229, %s243
      %p245 = scmp.eq.s32.totalorder %s27, 0
      %p246 = por %p244, %p245
      %s247 = ssub.s32 %s29, %s36
      %s248 = ssub.s32 %s28, %s40
      %s249 = sor.u32 %s247, %s248
      %p250 = scmp.eq.s32.totalorder %s249, 0
      %s252 = sadd.s32 %s251, 1
      %s253 = scalar_select %p250, %s251, %s252
      %p256 = pneg %p250
      %p257 = scmp.eq.s32.totalorder %s21, 3
      %p258 = por %p256, %p257
      %p259 = scmp.ne.s32.totalorder %s251, %s254
      %p260 = scmp.eq.s32.totalorder %s21, 0
      %p261 = por %p259, %p260
      %p262 = scmp.ne.s32.totalorder %s251, %s254
      %p263 = scmp.eq.s32.totalorder %s26, 3
      %p264 = por %p262, %p263
      %p265 = scmp.ne.s32.totalorder %s254, %s255
      %p266 = scmp.eq.s32.totalorder %s26, 0
      %p267 = por %p265, %p266
      %p268 = scmp.ne.s32.totalorder %s254, %s255
      %p269 = scmp.eq.s32.totalorder %s27, 3
      %p270 = por %p268, %p269
      %p272 = scmp.ne.s32.totalorder %s255, %s271
      %p273 = scmp.eq.s32.totalorder %s27, 0
      %p274 = por %p272, %p273
      %p275 = scmp.le.s32.totalorder 1, %s21
      %p276 = scmp.lt.s32.totalorder %s21, 5
      %p277 = pnand %p275, %p276
      %p278 = pneg %p277
      // Predicated region
      $region9: #{tpu_custom_call.1} parent=5 // pred_check
        _
      $region10: #{tpu_custom_call.1} parent=5 // pred_check_branch
        %280 = sbr.rel (%p277) target = $region12
      $region11: #{tpu_custom_call.1} parent=5 // pred_region
        %s281 = ssub.s32 %s21, 1
        // Predicated region
        $region13: #{tpu_custom_call.1} parent=11 // pred_check
          %p282 = pneg %p108
        $region14: #{tpu_custom_call.1} parent=11 // pred_check_branch
          %284 = sbr.rel (%p282) target = $region16
        $region15: #{tpu_custom_call.1} parent=11 // pred_region
          _
        $region16: #{tpu_custom_call.1} parent=11 // pred_fallthru
          _
        // Predicated region
        $region17: #{tpu_custom_call.1} parent=11 // pred_check
          %p285 = pneg %p129
        $region18: #{tpu_custom_call.1} parent=11 // pred_check_branch
          %287 = sbr.rel (%p285) target = $region20
        $region19: #{tpu_custom_call.1} parent=11 // pred_region
          _
        $region20: #{tpu_custom_call.1} parent=11 // pred_fallthru
          _
        // Predicated region
        $region21: #{tpu_custom_call.1} parent=11 // pred_check
          %p288 = pneg %p150
        $region22: #{tpu_custom_call.1} parent=11 // pred_check_branch
          %290 = sbr.rel (%p288) target = $region24
        $region23: #{tpu_custom_call.1} parent=11 // pred_region
          _
        $region24: #{tpu_custom_call.1} parent=11 // pred_fallthru
          _
        // Predicated region
        $region25: #{tpu_custom_call.1} parent=11 // pred_check
          %p291 = pneg %p171
        $region26: #{tpu_custom_call.1} parent=11 // pred_check_branch
          %293 = sbr.rel (%p291) target = $region28
        $region27: #{tpu_custom_call.1} parent=11 // pred_region
          _
        $region28: #{tpu_custom_call.1} parent=11 // pred_fallthru
          _
        // Predicated region
        $region29: #{tpu_custom_call.1} parent=11 // pred_check
          %p294 = pneg %p218
        $region30: #{tpu_custom_call.1} parent=11 // pred_check_branch
          %296 = sbr.rel (%p294) target = $region32
        $region31: #{tpu_custom_call.1} parent=11 // pred_region
          _
        $region32: #{tpu_custom_call.1} parent=11 // pred_fallthru
          _
        // Predicated region
        $region33: #{tpu_custom_call.1} parent=11 // pred_check
          %p297 = pneg %p239
        $region34: #{tpu_custom_call.1} parent=11 // pred_check_branch
          %299 = sbr.rel (%p297) target = $region36
        $region35: #{tpu_custom_call.1} parent=11 // pred_region
          _
        $region36: #{tpu_custom_call.1} parent=11 // pred_fallthru
          _
      $region12: #{tpu_custom_call.1} parent=5 // pred_fallthru
        _
      %p300 = scmp.lt.s32.totalorder %s21, 4
      // Predicated region
      $region37: #{tpu_custom_call.1} parent=5 // pred_check
        %p301 = pneg %p300
      $region38: #{tpu_custom_call.1} parent=5 // pred_check_branch
        %303 = sbr.rel (%p301) target = $region40
      $region39: #{tpu_custom_call.1} parent=5 // pred_region
        // Predicated region
        $region41: #{tpu_custom_call.1} parent=39 // pred_check
          %p304 = pneg %p53
        $region42: #{tpu_custom_call.1} parent=39 // pred_check_branch
          %306 = sbr.rel (%p304) target = $region44
        $region43: #{tpu_custom_call.1} parent=39 // pred_region
          %p307 = scmp.lt.s32.totalorder %s29, 1
          %s308 = scalar_select %p307, %s29, 1
          %s309 = smul.addr %s308, 2
          %s310 = smul.addr %s309, 4
          %s311 = scalar_lea.vmem %s0, %s310
        $region44: #{tpu_custom_call.1} parent=39 // pred_fallthru
          _
        // Predicated region
        $region45: #{tpu_custom_call.1} parent=39 // pred_check
          %p312 = pneg %p81
        $region46: #{tpu_custom_call.1} parent=39 // pred_check_branch
          %314 = sbr.rel (%p312) target = $region48
        $region47: #{tpu_custom_call.1} parent=39 // pred_region
          %p315 = scmp.lt.s32.totalorder %s29, 1
          %s316 = scalar_select %p315, %s29, 1
          %p317 = scmp.lt.s32.totalorder %s28, 1
          %s318 = scalar_select %p317, %s28, 1
          %s319 = smul.addr %s316, 2
          %s320 = sadd.s32 %s318, %s319
          %s321 = smul.addr %s320, 4
          %s322 = scalar_lea.vmem %s1, %s321
        $region48: #{tpu_custom_call.1} parent=39 // pred_fallthru
          _
        // Predicated region
        $region49: #{tpu_custom_call.1} parent=39 // pred_check
          %p323 = pneg %p191
        $region50: #{tpu_custom_call.1} parent=39 // pred_check_branch
          %325 = sbr.rel (%p323) target = $region52
        $region51: #{tpu_custom_call.1} parent=39 // pred_region
          #allocation7 [shape = 'u32[6]{0}', space=smem, size = 0x18, scoped, tag = 'DMA stride descriptor']
          %s326 = sand.u32 %s181, 1
          %s327 = scalar_lea.sflag [#allocation3], %s326
          %s328 = sand.u32 %s181, 1
          %s329 = smul.addr %s328, 512
          %s330 = scalar_lea.vmem [#allocation2], %s329
          %s331 = smul.u32 16, %s28
          %s333 = ssub.s32 8192, 8192
          %334 = vsyncadd %s327, %s333
          %s335 = smul.addr %s331, 2
          %s336 = smul.addr %s335, 128
          %s337 = scalar_lea.hbm %s6, %s336
          %s339 = sshll.u32 1, 14
          %s340 = sxor.u32 4294967295, %s339
          %s342 = sld [smem:[#allocation0]]
          %s343 = sadd.s32 2, %s342
          %s345 = sshll.u32 7, 26
          %s346 = sxor.u32 4294967295, %s345
          %s347 = sand.u32 0, %s346
          %s348 = sshll.u32 %s343, 26
          %s349 = sor.u32 %s347, %s348
          %s350 = sshll.u32 %s330, 4
          %s351 = int_to_ptr.vmem [resolvable:$true] %s350
          %357 = sst [smem:[#allocation7]] 8192
          %s358 = scalar_lea.smem [#allocation7], 1
          %359 = sst [smem:[%s358]] 4096
          %s360 = scalar_lea.smem [#allocation7], 2
          %361 = sst [smem:[%s360]] 16
          %s362 = scalar_lea.smem [#allocation7], 3
          %363 = sst [smem:[%s362]] 256
          %s364 = scalar_lea.smem [#allocation7], 4
          %365 = sst [smem:[%s364]] 256
          %s366 = scalar_lea.smem [#allocation7], 5
          %367 = sst [smem:[%s366]] 16
          %369 = dma.general %s337, 8192, %s351, %s327, 131072, [#allocation7], %s349, 0
        $region52: #{tpu_custom_call.1} parent=39 // pred_fallthru
          _
      $region40: #{tpu_custom_call.1} parent=5 // pred_fallthru
        _
      %p370 = scmp.le.s32.totalorder 1, %s21
      %p371 = scmp.lt.s32.totalorder %s21, 5
      %p372 = pnand %p370, %p371
      %p373 = pneg %p372
      // Predicated region
      $region53: #{tpu_custom_call.1} parent=5 // pred_check
        _
      $region54: #{tpu_custom_call.1} parent=5 // pred_check_branch
        %375 = sbr.rel (%p372) target = $region56
      $region55: #{tpu_custom_call.1} parent=5 // pred_region
        %s376 = ssub.s32 %s21, 1
        %s377 = sand.u32 %s184, 1
        %s378 = scalar_lea.sflag [#allocation3], %s377
        %s379 = sand.u32 %s184, 1
        %s380 = smul.addr %s379, 512
        %s381 = scalar_lea.vmem [#allocation2], %s380
        // Predicated region
        $region57: #{tpu_custom_call.1} parent=55 // pred_check
          %p382 = pneg %p197
        $region58: #{tpu_custom_call.1} parent=55 // pred_check_branch
          %384 = sbr.rel (%p382) target = $region60
        $region59: #{tpu_custom_call.1} parent=55 // pred_region
          %385 = dma.done %s378, 8192
        $region60: #{tpu_custom_call.1} parent=55 // pred_fallthru
          _
        %p386 = scmp.lt.s32.totalorder %s31, 1
        %s387 = scalar_select %p386, %s31, 1
        %s388 = smul.addr %s387, 2
        %s389 = smul.addr %s388, 4
        %s390 = scalar_lea.vmem %s0, %s389
        %p391 = pneg %p59
        %p392 = pneg %p56
        %p393 = scmp.lt.s32.totalorder %s31, 1
        %s394 = scalar_select %p393, %s31, 1
        %p395 = scmp.lt.s32.totalorder %s30, 1
        %s396 = scalar_select %p395, %s30, 1
        %s397 = smul.addr %s394, 2
        %s398 = sadd.s32 %s396, %s397
        %s399 = smul.addr %s398, 4
        %s400 = scalar_lea.vmem %s1, %s399
        %p401 = pneg %p87
        %p402 = pneg %p84
        %p403 = pneg %p108
        %p404 = pneg %p105
        %p405 = pneg %p129
        %p406 = pneg %p126
        %p407 = pneg %p150
        %p408 = pneg %p147
        %p409 = pneg %p171
        %p410 = pneg %p168
        %s411 = sand.u32 %s184, 1
        %s412 = scalar_lea.sflag [#allocation3], %s411
        %s413 = sand.u32 %s184, 1
        %s414 = smul.addr %s413, 512
        %s415 = scalar_lea.vmem [#allocation2], %s414
        %p416 = pneg %p197
        %p417 = pneg %p194
        %p418 = pneg %p218
        %p419 = pneg %p215
        %p420 = pneg %p239
        %p421 = pneg %p236
        %p422 = pneg %p267
        %p423 = pneg %p264
        %s424 = sand.u32 %s254, 1
        %s425 = scalar_lea.sflag [#allocation4], %s424
        %s426 = sand.u32 %s254, 1
        %s427 = smul.addr %s426, 8
        %s428 = scalar_lea.vmem [#allocation5], %s427
        %p429 = scmp.lt.s32.totalorder %s31, 1
        %s430 = scalar_select %p429, %s31, 1
        %s431 = smul.addr %s430, 2
        %s432 = smul.addr %s431, 4
        %s433 = scalar_lea.vmem %s0, %s432
        %p434 = scmp.lt.s32.totalorder %s31, 1
        %s435 = scalar_select %p434, %s31, 1
        %p436 = scmp.lt.s32.totalorder %s30, 1
        %s437 = scalar_select %p436, %s30, 1
        %s438 = smul.addr %s435, 2
        %s439 = sadd.s32 %s437, %s438
        %s440 = smul.addr %s439, 4
        %s441 = scalar_lea.vmem %s1, %s440
        %s442 = smul.u32 16, %s30
        %v443 = vld [vmem:[%s433] sm:$0xff]
        %v444 = vld [vmem:[%s441] sm:$0xf]
        %v445 = vld [vmem:[%s2] sm:$0xff]
        %v446 = vld [vmem:[%s2 + $0x8] sm:$0xff]
        %v447 = vld [vmem:[%s3] sm:$0xff]
        %v448 = vld [vmem:[%s3 + $0x8] sm:$0xff]
        %450 = vset.pattern.permute.xlu0 0
        %451 = vperm.xlu0 %450, %v447
        %v452 = vpop.permute.xlu0 %451
        %455 = vset.pattern.permute.xlu0 0
        %456 = vperm.xlu0 %455, %v448
        %v457 = vpop.permute.xlu0 %456
        %v460 = vcombine.high %v443, %v443
        %vm461 = vcmask 31744
        %v463 = vsel %vm461, %v445, 0
        %v466 = vsel %vm461, %v446, 0
        %vm468 = vcmask 1043456
        %v469 = vsel %vm468, %v443, 0
        %v471 = vsel %vm468, %v460, 0
        %473 = vmatprep.subr.mxu0 0.0
        %474 = vmatpush1.msra.mxu0 0.0
        %475 = vmatprep.subr.mxu0 0.0
        %476 = vmatpush1.msra.mxu0 0.0
        %477 = vmatprep.subr.mxu0 0.0
        %478 = vmatpush1.msra.mxu0 0.0
        %479 = vmatprep.subr.mxu0 0.0
        %480 = vmatpush1.msra.mxu0 0.0
        %481 = vmatprep.subr.mxu0 0.0
        %482 = vmatpush1.msra.mxu0 0.0
        %483 = vmatprep.subr.mxu0 0.0
        %484 = vmatpush1.msra.mxu0 0.0
        %485 = vmatprep.subr.mxu0 0.0
        %486 = vmatpush1.msra.mxu0 0.0
        %487 = vmatprep.subr.mxu0 0.0
        %488 = vmatpush1.msra.mxu0 0.0
        %489 = vmatprep.subr.mxu0 0.0
        %490 = vmatpush1.msra.mxu0 0.0
        %491 = vmatprep.subr.mxu0 0.0
        %492 = vmatpush1.msra.mxu0 0.0
        %493 = vmatprep.subr.mxu0 0.0
        %494 = vmatpush1.msra.mxu0 0.0
        %495 = vmatprep.subr.mxu0 0.0
        %496 = vmatpush1.msra.mxu0 0.0
        %497 = vmatprep.subr.mxu0 0.0
        %498 = vmatpush1.msra.mxu0 0.0
        %499 = vmatprep.subr.mxu0 0.0
        %500 = vmatpush1.msra.mxu0 0.0
        %501 = vmatprep.subr.mxu0 0.0
        %502 = vmatpush1.msra.mxu0 0.0
        %503 = vmatprep.subr.mxu0 %v471
        %504 = vmatpush1.msra.mxu0 %v469
        %505 = vmatprep.subr.mxu0 0.0
        %506 = vmatpush2.msra.mxu0 0.0
        %507 = vmatprep.subr.mxu0 0.0
        %508 = vmatpush2.msra.mxu0 0.0
        %509 = vmatprep.subr.mxu0 0.0
        %510 = vmatpush2.msra.mxu0 0.0
        %511 = vmatprep.subr.mxu0 0.0
        %512 = vmatpush2.msra.mxu0 0.0
        %513 = vmatprep.subr.mxu0 0.0
        %514 = vmatpush2.msra.mxu0 0.0
        %515 = vmatprep.subr.mxu0 0.0
        %516 = vmatpush2.msra.mxu0 0.0
        %517 = vmatprep.subr.mxu0 0.0
        %518 = vmatpush2.msra.mxu0 0.0
        %519 = vmatprep.subr.mxu0 0.0
        %520 = vmatpush2.msra.mxu0 0.0
        %521 = vmatprep.subr.mxu0 0.0
        %522 = vmatpush2.msra.mxu0 0.0
        %523 = vmatprep.subr.mxu0 0.0
        %524 = vmatpush2.msra.mxu0 0.0
        %525 = vmatprep.subr.mxu0 0.0
        %526 = vmatpush2.msra.mxu0 0.0
        %527 = vmatprep.subr.mxu0 0.0
        %528 = vmatpush2.msra.mxu0 0.0
        %529 = vmatprep.subr.mxu0 0.0
        %530 = vmatpush2.msra.mxu0 0.0
        %531 = vmatprep.subr.mxu0 0.0
        %532 = vmatpush2.msra.mxu0 0.0
        %533 = vmatprep.subr.mxu0 0.0
        %534 = vmatpush2.msra.mxu0 0.0
        %535 = vmatprep.subr.mxu0 0.0
        %536 = vmatpush2.msra.mxu0 0.0
        %537 = vmatprep.mubr.f32.mxu0 0.0
        %538 = vmatmul.mubr.f32.gmra.mxu0 %v463
        %v539 = vpop.f32.mrf.mxu0
        %v540 = vadd.f32 %v452, %v539
        %v541 = vpop.f32.mrf.mxu0
        %v542 = vadd.f32 %v452, %v541
        %543 = vmatprep.mubr.f32.mxu0 0.0
        %544 = vmatmul.mubr.f32.gmra.mxu0 %v466
        %v545 = vpop.f32.mrf.mxu0
        %v546 = vadd.f32 %v457, %v545
        %v547 = vpop.f32.mrf.mxu0
        %v548 = vadd.f32 %v457, %v547
        %549 = vdwg.mxu0
        %v550 = vld [vmem:[%s4] sm:$0xff]
        %v551 = vld [vmem:[%s5] sm:$0xff]
        %553 = vset.pattern.permute.xlu0 0
        %554 = vperm.xlu0 %553, %v551
        %v555 = vpop.permute.xlu0 %554
        %v558 = vsel %vm461, %v550, 0
        %v561 = vsel %vm468, %v444, 0
        %563 = vmatprep.subr.mxu0 0.0
        %564 = vmatpush1.msra.mxu0 0.0
        %565 = vmatprep.subr.mxu0 0.0
        %566 = vmatpush1.msra.mxu0 0.0
        %567 = vmatprep.subr.mxu0 0.0
        %568 = vmatpush1.msra.mxu0 0.0
        %569 = vmatprep.subr.mxu0 0.0
        %570 = vmatpush1.msra.mxu0 0.0
        %571 = vmatprep.subr.mxu0 0.0
        %572 = vmatpush1.msra.mxu0 0.0
        %573 = vmatprep.subr.mxu0 0.0
        %574 = vmatpush1.msra.mxu0 0.0
        %575 = vmatprep.subr.mxu0 0.0
        %576 = vmatpush1.msra.mxu0 0.0
        %577 = vmatprep.subr.mxu0 0.0
        %578 = vmatpush1.msra.mxu0 0.0
        %579 = vmatprep.subr.mxu0 0.0
        %580 = vmatpush1.msra.mxu0 0.0
        %581 = vmatprep.subr.mxu0 0.0
        %582 = vmatpush1.msra.mxu0 0.0
        %583 = vmatprep.subr.mxu0 0.0
        %584 = vmatpush1.msra.mxu0 0.0
        %585 = vmatprep.subr.mxu0 0.0
        %586 = vmatpush1.msra.mxu0 0.0
        %587 = vmatprep.subr.mxu0 0.0
        %588 = vmatpush1.msra.mxu0 0.0
        %589 = vmatprep.subr.mxu0 0.0
        %590 = vmatpush1.msra.mxu0 0.0
        %591 = vmatprep.subr.mxu0 0.0
        %592 = vmatpush1.msra.mxu0 0.0
        %593 = vmatprep.subr.mxu0 0.0
        %594 = vmatpush1.msra.mxu0 %v561
        %595 = vmatprep.subr.mxu0 0.0
        %596 = vmatpush2.msra.mxu0 0.0
        %597 = vmatprep.subr.mxu0 0.0
        %598 = vmatpush2.msra.mxu0 0.0
        %599 = vmatprep.subr.mxu0 0.0
        %600 = vmatpush2.msra.mxu0 0.0
        %601 = vmatprep.subr.mxu0 0.0
        %602 = vmatpush2.msra.mxu0 0.0
        %603 = vmatprep.subr.mxu0 0.0
        %604 = vmatpush2.msra.mxu0 0.0
        %605 = vmatprep.subr.mxu0 0.0
        %606 = vmatpush2.msra.mxu0 0.0
        %607 = vmatprep.subr.mxu0 0.0
        %608 = vmatpush2.msra.mxu0 0.0
        %609 = vmatprep.subr.mxu0 0.0
        %610 = vmatpush2.msra.mxu0 0.0
        %611 = vmatprep.subr.mxu0 0.0
        %612 = vmatpush2.msra.mxu0 0.0
        %613 = vmatprep.subr.mxu0 0.0
        %614 = vmatpush2.msra.mxu0 0.0
        %615 = vmatprep.subr.mxu0 0.0
        %616 = vmatpush2.msra.mxu0 0.0
        %617 = vmatprep.subr.mxu0 0.0
        %618 = vmatpush2.msra.mxu0 0.0
        %619 = vmatprep.subr.mxu0 0.0
        %620 = vmatpush2.msra.mxu0 0.0
        %621 = vmatprep.subr.mxu0 0.0
        %622 = vmatpush2.msra.mxu0 0.0
        %623 = vmatprep.subr.mxu0 0.0
        %624 = vmatpush2.msra.mxu0 0.0
        %625 = vmatprep.subr.mxu0 0.0
        %626 = vmatpush2.msra.mxu0 0.0
        %627 = vmatprep.mubr.f32.mxu0 0.0
        %628 = vmatmul.mubr.f32.gmra.mxu0 %v558
        %v629 = vpop.f32.mrf.mxu0
        %v630 = vadd.f32 %v555, %v629
        %v631 = vpop.f32.mrf.mxu0
        %632 = vdwg.mxu0
        %v633 = vld [vmem:[%s381] sm:$0xff]
        %v634 = vld [vmem:[%s381 + $0x8] sm:$0xff]
        %v635 = vld [vmem:[%s381 + $0x10] sm:$0xff]
        %v636 = vld [vmem:[%s381 + $0x18] sm:$0xff]
        %v637 = vld [vmem:[%s381 + $0x20] sm:$0xff]
        %v638 = vld [vmem:[%s381 + $0x28] sm:$0xff]
        %v639 = vld [vmem:[%s381 + $0x30] sm:$0xff]
        %v640 = vld [vmem:[%s381 + $0x38] sm:$0xff]
        %v641 = vld [vmem:[%s381 + $0x40] sm:$0xff]
        %v642 = vld [vmem:[%s381 + $0x48] sm:$0xff]
        %v643 = vld [vmem:[%s381 + $0x50] sm:$0xff]
        %v644 = vld [vmem:[%s381 + $0x58] sm:$0xff]
        %v645 = vld [vmem:[%s381 + $0x60] sm:$0xff]
        %v646 = vld [vmem:[%s381 + $0x68] sm:$0xff]
        %v647 = vld [vmem:[%s381 + $0x70] sm:$0xff]
        %v648 = vld [vmem:[%s381 + $0x78] sm:$0xff]
        %v649 = vld [vmem:[%s381 + $0x80] sm:$0xff]
        %v650 = vld [vmem:[%s381 + $0x88] sm:$0xff]
        %v651 = vld [vmem:[%s381 + $0x90] sm:$0xff]
        %v652 = vld [vmem:[%s381 + $0x98] sm:$0xff]
        %v653 = vld [vmem:[%s381 + $0xa0] sm:$0xff]
        %v654 = vld [vmem:[%s381 + $0xa8] sm:$0xff]
        %v655 = vld [vmem:[%s381 + $0xb0] sm:$0xff]
        %v656 = vld [vmem:[%s381 + $0xb8] sm:$0xff]
        %v657 = vld [vmem:[%s381 + $0xc0] sm:$0xff]
        %v658 = vld [vmem:[%s381 + $0xc8] sm:$0xff]
        %v659 = vld [vmem:[%s381 + $0xd0] sm:$0xff]
        %v660 = vld [vmem:[%s381 + $0xd8] sm:$0xff]
        %v661 = vld [vmem:[%s381 + $0xe0] sm:$0xff]
        %v662 = vld [vmem:[%s381 + $0xe8] sm:$0xff]
        %v663 = vld [vmem:[%s381 + $0xf0] sm:$0xff]
        %v664 = vld [vmem:[%s381 + $0xf8] sm:$0xff]
        %665 = vxpose.xlu0.b32.start [1/16] %v630, 128
        %666 = vxpose.xlu0.b32.cont [2/16] 0.0, 128
        %667 = vxpose.xlu0.b32.cont [3/16] 0.0, 128
        %668 = vxpose.xlu0.b32.cont [4/16] 0.0, 128
        %669 = vxpose.xlu0.b32.cont [5/16] 0.0, 128
        %670 = vxpose.xlu0.b32.cont [6/16] 0.0, 128
        %671 = vxpose.xlu0.b32.cont [7/16] 0.0, 128
        %672 = vxpose.xlu0.b32.cont [8/16] 0.0, 128
        %673 = vxpose.xlu0.b32.cont [9/16] 0.0, 128
        %674 = vxpose.xlu0.b32.cont [10/16] 0.0, 128
        %675 = vxpose.xlu0.b32.cont [11/16] 0.0, 128
        %676 = vxpose.xlu0.b32.cont [12/16] 0.0, 128
        %677 = vxpose.xlu0.b32.cont [13/16] 0.0, 128
        %678 = vxpose.xlu0.b32.cont [14/16] 0.0, 128
        %679 = vxpose.xlu0.b32.cont [15/16] 0.0, 128
        %680 = vxpose.xlu0.b32.end [16/16] 0.0, 128
        %v681 = vpop.trf.xlu0
        %v682 = vpop.trf.xlu0
        %v683 = vpop.trf.xlu0
        %v684 = vpop.trf.xlu0
        %v685 = vpop.trf.xlu0
        %v686 = vpop.trf.xlu0
        %v687 = vpop.trf.xlu0
        %v688 = vpop.trf.xlu0
        %v689 = vpop.trf.xlu0
        %v690 = vpop.trf.xlu0
        %v691 = vpop.trf.xlu0
        %v692 = vpop.trf.xlu0
        %v693 = vpop.trf.xlu0
        %v694 = vpop.trf.xlu0
        %v695 = vpop.trf.xlu0
        %v696 = vpop.trf.xlu0
        %v698 = vsel %vm461, %v681, 0
        %v701 = vsel %vm461, %v682, 0
        %v704 = vsel %vm461, %v683, 0
        %v707 = vsel %vm461, %v684, 0
        %v710 = vsel %vm461, %v685, 0
        %v713 = vsel %vm461, %v686, 0
        %v716 = vsel %vm461, %v687, 0
        %v719 = vsel %vm461, %v688, 0
        %v722 = vsel %vm461, %v689, 0
        %v725 = vsel %vm461, %v690, 0
        %v728 = vsel %vm461, %v691, 0
        %v731 = vsel %vm461, %v692, 0
        %v734 = vsel %vm461, %v693, 0
        %v737 = vsel %vm461, %v694, 0
        %v740 = vsel %vm461, %v695, 0
        %v743 = vsel %vm461, %v696, 0
        %v746 = vsel %vm468, %v540, 0
        %v749 = vsel %vm468, %v542, 0
        %751 = vmatprep.subr.mxu0 0.0
        %752 = vmatpush1.msra.mxu0 0.0
        %753 = vmatprep.subr.mxu0 0.0
        %754 = vmatpush1.msra.mxu0 0.0
        %755 = vmatprep.subr.mxu0 0.0
        %756 = vmatpush1.msra.mxu0 0.0
        %757 = vmatprep.subr.mxu0 0.0
        %758 = vmatpush1.msra.mxu0 0.0
        %759 = vmatprep.subr.mxu0 0.0
        %760 = vmatpush1.msra.mxu0 0.0
        %761 = vmatprep.subr.mxu0 0.0
        %762 = vmatpush1.msra.mxu0 0.0
        %763 = vmatprep.subr.mxu0 0.0
        %764 = vmatpush1.msra.mxu0 0.0
        %765 = vmatprep.subr.mxu0 0.0
        %766 = vmatpush1.msra.mxu0 0.0
        %767 = vmatprep.subr.mxu0 0.0
        %768 = vmatpush1.msra.mxu0 0.0
        %769 = vmatprep.subr.mxu0 0.0
        %770 = vmatpush1.msra.mxu0 0.0
        %771 = vmatprep.subr.mxu0 0.0
        %772 = vmatpush1.msra.mxu0 0.0
        %773 = vmatprep.subr.mxu0 0.0
        %774 = vmatpush1.msra.mxu0 0.0
        %775 = vmatprep.subr.mxu0 0.0
        %776 = vmatpush1.msra.mxu0 0.0
        %777 = vmatprep.subr.mxu0 0.0
        %778 = vmatpush1.msra.mxu0 0.0
        %779 = vmatprep.subr.mxu0 0.0
        %780 = vmatpush1.msra.mxu0 0.0
        %781 = vmatprep.subr.mxu0 %v749
        %782 = vmatpush1.msra.mxu0 %v746
        %783 = vmatprep.subr.mxu0 0.0
        %784 = vmatpush2.msra.mxu0 0.0
        %785 = vmatprep.subr.mxu0 0.0
        %786 = vmatpush2.msra.mxu0 0.0
        %787 = vmatprep.subr.mxu0 0.0
        %788 = vmatpush2.msra.mxu0 0.0
        %789 = vmatprep.subr.mxu0 0.0
        %790 = vmatpush2.msra.mxu0 0.0
        %791 = vmatprep.subr.mxu0 0.0
        %792 = vmatpush2.msra.mxu0 0.0
        %793 = vmatprep.subr.mxu0 0.0
        %794 = vmatpush2.msra.mxu0 0.0
        %795 = vmatprep.subr.mxu0 0.0
        %796 = vmatpush2.msra.mxu0 0.0
        %797 = vmatprep.subr.mxu0 0.0
        %798 = vmatpush2.msra.mxu0 0.0
        %799 = vmatprep.subr.mxu0 0.0
        %800 = vmatpush2.msra.mxu0 0.0
        %801 = vmatprep.subr.mxu0 0.0
        %802 = vmatpush2.msra.mxu0 0.0
        %803 = vmatprep.subr.mxu0 0.0
        %804 = vmatpush2.msra.mxu0 0.0
        %805 = vmatprep.subr.mxu0 0.0
        %806 = vmatpush2.msra.mxu0 0.0
        %807 = vmatprep.subr.mxu0 0.0
        %808 = vmatpush2.msra.mxu0 0.0
        %809 = vmatprep.subr.mxu0 0.0
        %810 = vmatpush2.msra.mxu0 0.0
        %811 = vmatprep.subr.mxu0 0.0
        %812 = vmatpush2.msra.mxu0 0.0
        %813 = vmatprep.subr.mxu0 0.0
        %814 = vmatpush2.msra.mxu0 0.0
        %815 = vmatprep.mubr.f32.mxu0 0.0
        %816 = vmatmul.mubr.f32.gmra.mxu0 %v698
        %v817 = vpop.f32.mrf.mxu0
        %v818 = vadd.f32 %v633, %v817
        %v819 = vpop.f32.mrf.mxu0
        %v820 = vadd.f32 %v634, %v819
        %821 = vmatprep.mubr.f32.mxu0 0.0
        %822 = vmatmul.mubr.f32.gmra.mxu0 %v701
        %v823 = vpop.f32.mrf.mxu0
        %v824 = vadd.f32 %v635, %v823
        %v825 = vpop.f32.mrf.mxu0
        %v826 = vadd.f32 %v636, %v825
        %827 = vmatprep.mubr.f32.mxu0 0.0
        %828 = vmatmul.mubr.f32.gmra.mxu0 %v704
        %v829 = vpop.f32.mrf.mxu0
        %v830 = vadd.f32 %v637, %v829
        %v831 = vpop.f32.mrf.mxu0
        %v832 = vadd.f32 %v638, %v831
        %833 = vmatprep.mubr.f32.mxu0 0.0
        %834 = vmatmul.mubr.f32.gmra.mxu0 %v707
        %v835 = vpop.f32.mrf.mxu0
        %v836 = vadd.f32 %v639, %v835
        %v837 = vpop.f32.mrf.mxu0
        %v838 = vadd.f32 %v640, %v837
        %839 = vmatprep.mubr.f32.mxu0 0.0
        %840 = vmatmul.mubr.f32.gmra.mxu0 %v710
        %v841 = vpop.f32.mrf.mxu0
        %v842 = vadd.f32 %v641, %v841
        %v843 = vpop.f32.mrf.mxu0
        %v844 = vadd.f32 %v642, %v843
        %845 = vmatprep.mubr.f32.mxu0 0.0
        %846 = vmatmul.mubr.f32.gmra.mxu0 %v713
        %v847 = vpop.f32.mrf.mxu0
        %v848 = vadd.f32 %v643, %v847
        %v849 = vpop.f32.mrf.mxu0
        %v850 = vadd.f32 %v644, %v849
        %851 = vmatprep.mubr.f32.mxu0 0.0
        %852 = vmatmul.mubr.f32.gmra.mxu0 %v716
        %v853 = vpop.f32.mrf.mxu0
        %v854 = vadd.f32 %v645, %v853
        %v855 = vpop.f32.mrf.mxu0
        %v856 = vadd.f32 %v646, %v855
        %857 = vmatprep.mubr.f32.mxu0 0.0
        %858 = vmatmul.mubr.f32.gmra.mxu0 %v719
        %v859 = vpop.f32.mrf.mxu0
        %v860 = vadd.f32 %v647, %v859
        %v861 = vpop.f32.mrf.mxu0
        %v862 = vadd.f32 %v648, %v861
        %863 = vmatprep.mubr.f32.mxu0 0.0
        %864 = vmatmul.mubr.f32.gmra.mxu0 %v722
        %v865 = vpop.f32.mrf.mxu0
        %v866 = vadd.f32 %v649, %v865
        %v867 = vpop.f32.mrf.mxu0
        %v868 = vadd.f32 %v650, %v867
        %869 = vmatprep.mubr.f32.mxu0 0.0
        %870 = vmatmul.mubr.f32.gmra.mxu0 %v725
        %v871 = vpop.f32.mrf.mxu0
        %v872 = vadd.f32 %v651, %v871
        %v873 = vpop.f32.mrf.mxu0
        %v874 = vadd.f32 %v652, %v873
        %875 = vmatprep.mubr.f32.mxu0 0.0
        %876 = vmatmul.mubr.f32.gmra.mxu0 %v728
        %v877 = vpop.f32.mrf.mxu0
        %v878 = vadd.f32 %v653, %v877
        %v879 = vpop.f32.mrf.mxu0
        %v880 = vadd.f32 %v654, %v879
        %881 = vmatprep.mubr.f32.mxu0 0.0
        %882 = vmatmul.mubr.f32.gmra.mxu0 %v731
        %v883 = vpop.f32.mrf.mxu0
        %v884 = vadd.f32 %v655, %v883
        %v885 = vpop.f32.mrf.mxu0
        %v886 = vadd.f32 %v656, %v885
        %887 = vmatprep.mubr.f32.mxu0 0.0
        %888 = vmatmul.mubr.f32.gmra.mxu0 %v734
        %v889 = vpop.f32.mrf.mxu0
        %v890 = vadd.f32 %v657, %v889
        %v891 = vpop.f32.mrf.mxu0
        %v892 = vadd.f32 %v658, %v891
        %893 = vmatprep.mubr.f32.mxu0 0.0
        %894 = vmatmul.mubr.f32.gmra.mxu0 %v737
        %v895 = vpop.f32.mrf.mxu0
        %v896 = vadd.f32 %v659, %v895
        %v897 = vpop.f32.mrf.mxu0
        %v898 = vadd.f32 %v660, %v897
        %899 = vmatprep.mubr.f32.mxu0 0.0
        %900 = vmatmul.mubr.f32.gmra.mxu0 %v740
        %v901 = vpop.f32.mrf.mxu0
        %v902 = vadd.f32 %v661, %v901
        %v903 = vpop.f32.mrf.mxu0
        %v904 = vadd.f32 %v662, %v903
        %905 = vmatprep.mubr.f32.mxu0 0.0
        %906 = vmatmul.mubr.f32.gmra.mxu0 %v743
        %v907 = vpop.f32.mrf.mxu0
        %v908 = vadd.f32 %v663, %v907
        %v909 = vpop.f32.mrf.mxu0
        %v910 = vadd.f32 %v664, %v909
        %911 = vdwg.mxu0
        %v912 = vmax.f32 %v818, %v820
        %913 = vmax.xlane.f32.xlu0 %v912
        %v914 = vpop.xlane.xlu0 %913
        %v915 = vmax.f32 %v824, %v826
        %916 = vmax.xlane.f32.xlu0 %v915
        %v917 = vpop.xlane.xlu0 %916
        %v918 = vmax.f32 %v830, %v832
        %919 = vmax.xlane.f32.xlu0 %v918
        %v920 = vpop.xlane.xlu0 %919
        %v921 = vmax.f32 %v836, %v838
        %922 = vmax.xlane.f32.xlu0 %v921
        %v923 = vpop.xlane.xlu0 %922
        %v924 = vmax.f32 %v842, %v844
        %925 = vmax.xlane.f32.xlu0 %v924
        %v926 = vpop.xlane.xlu0 %925
        %v927 = vmax.f32 %v848, %v850
        %928 = vmax.xlane.f32.xlu0 %v927
        %v929 = vpop.xlane.xlu0 %928
        %v930 = vmax.f32 %v854, %v856
        %931 = vmax.xlane.f32.xlu0 %v930
        %v932 = vpop.xlane.xlu0 %931
        %v933 = vmax.f32 %v860, %v862
        %934 = vmax.xlane.f32.xlu0 %v933
        %v935 = vpop.xlane.xlu0 %934
        %v936 = vmax.f32 %v866, %v868
        %937 = vmax.xlane.f32.xlu0 %v936
        %v938 = vpop.xlane.xlu0 %937
        %v939 = vmax.f32 %v872, %v874
        %940 = vmax.xlane.f32.xlu0 %v939
        %v941 = vpop.xlane.xlu0 %940
        %v942 = vmax.f32 %v878, %v880
        %943 = vmax.xlane.f32.xlu0 %v942
        %v944 = vpop.xlane.xlu0 %943
        %v945 = vmax.f32 %v884, %v886
        %946 = vmax.xlane.f32.xlu0 %v945
        %v947 = vpop.xlane.xlu0 %946
        %v948 = vmax.f32 %v890, %v892
        %949 = vmax.xlane.f32.xlu0 %v948
        %v950 = vpop.xlane.xlu0 %949
        %v951 = vmax.f32 %v896, %v898
        %952 = vmax.xlane.f32.xlu0 %v951
        %v953 = vpop.xlane.xlu0 %952
        %v954 = vmax.f32 %v902, %v904
        %955 = vmax.xlane.f32.xlu0 %v954
        %v956 = vpop.xlane.xlu0 %955
        %v957 = vmax.f32 %v908, %v910
        %958 = vmax.xlane.f32.xlu0 %v957
        %v959 = vpop.xlane.xlu0 %958
        %v960 = vsub.f32 %v818, %v914
        %v961 = vsub.f32 %v820, %v914
        %v962 = vsub.f32 %v824, %v917
        %v963 = vsub.f32 %v826, %v917
        %v964 = vsub.f32 %v830, %v920
        %v965 = vsub.f32 %v832, %v920
        %v966 = vsub.f32 %v836, %v923
        %v967 = vsub.f32 %v838, %v923
        %v968 = vsub.f32 %v842, %v926
        %v969 = vsub.f32 %v844, %v926
        %v970 = vsub.f32 %v848, %v929
        %v971 = vsub.f32 %v850, %v929
        %v972 = vsub.f32 %v854, %v932
        %v973 = vsub.f32 %v856, %v932
        %v974 = vsub.f32 %v860, %v935
        %v975 = vsub.f32 %v862, %v935
        %v976 = vsub.f32 %v866, %v938
        %v977 = vsub.f32 %v868, %v938
        %v978 = vsub.f32 %v872, %v941
        %v979 = vsub.f32 %v874, %v941
        %v980 = vsub.f32 %v878, %v944
        %v981 = vsub.f32 %v880, %v944
        %v982 = vsub.f32 %v884, %v947
        %v983 = vsub.f32 %v886, %v947
        %v984 = vsub.f32 %v890, %v950
        %v985 = vsub.f32 %v892, %v950
        %v986 = vsub.f32 %v896, %v953
        %v987 = vsub.f32 %v898, %v953
        %v988 = vsub.f32 %v902, %v956
        %v989 = vsub.f32 %v904, %v956
        %v990 = vsub.f32 %v908, %v959
        %v991 = vsub.f32 %v910, %v959
        %v992 = vmul.f32 %v960, 1.442695
        %v993 = vpow.pop %v992
        %v994 = vmul.f32 %v961, 1.442695
        %v995 = vpow.pop %v994
        %v996 = vmul.f32 %v962, 1.442695
        %v997 = vpow.pop %v996
        %v998 = vmul.f32 %v963, 1.442695
        %v999 = vpow.pop %v998
        %v1000 = vmul.f32 %v964, 1.442695
        %v1001 = vpow.pop %v1000
        %v1002 = vmul.f32 %v965, 1.442695
        %v1003 = vpow.pop %v1002
        %v1004 = vmul.f32 %v966, 1.442695
        %v1005 = vpow.pop %v1004
        %v1006 = vmul.f32 %v967, 1.442695
        %v1007 = vpow.pop %v1006
        %v1008 = vmul.f32 %v968, 1.442695
        %v1009 = vpow.pop %v1008
        %v1010 = vmul.f32 %v969, 1.442695
        %v1011 = vpow.pop %v1010
        %v1012 = vmul.f32 %v970, 1.442695
        %v1013 = vpow.pop %v1012
        %v1014 = vmul.f32 %v971, 1.442695
        %v1015 = vpow.pop %v1014
        %v1016 = vmul.f32 %v972, 1.442695
        %v1017 = vpow.pop %v1016
        %v1018 = vmul.f32 %v973, 1.442695
        %v1019 = vpow.pop %v1018
        %v1020 = vmul.f32 %v974, 1.442695
        %v1021 = vpow.pop %v1020
        %v1022 = vmul.f32 %v975, 1.442695
        %v1023 = vpow.pop %v1022
        %v1024 = vmul.f32 %v976, 1.442695
        %v1025 = vpow.pop %v1024
        %v1026 = vmul.f32 %v977, 1.442695
        %v1027 = vpow.pop %v1026
        %v1028 = vmul.f32 %v978, 1.442695
        %v1029 = vpow.pop %v1028
        %v1030 = vmul.f32 %v979, 1.442695
        %v1031 = vpow.pop %v1030
        %v1032 = vmul.f32 %v980, 1.442695
        %v1033 = vpow.pop %v1032
        %v1034 = vmul.f32 %v981, 1.442695
        %v1035 = vpow.pop %v1034
        %v1036 = vmul.f32 %v982, 1.442695
        %v1037 = vpow.pop %v1036
        %v1038 = vmul.f32 %v983, 1.442695
        %v1039 = vpow.pop %v1038
        %v1040 = vmul.f32 %v984, 1.442695
        %v1041 = vpow.pop %v1040
        %v1042 = vmul.f32 %v985, 1.442695
        %v1043 = vpow.pop %v1042
        %v1044 = vmul.f32 %v986, 1.442695
        %v1045 = vpow.pop %v1044
        %v1046 = vmul.f32 %v987, 1.442695
        %v1047 = vpow.pop %v1046
        %v1048 = vmul.f32 %v988, 1.442695
        %v1049 = vpow.pop %v1048
        %v1050 = vmul.f32 %v989, 1.442695
        %v1051 = vpow.pop %v1050
        %v1052 = vmul.f32 %v990, 1.442695
        %v1053 = vpow.pop %v1052
        %v1054 = vmul.f32 %v991, 1.442695
        %v1055 = vpow.pop %v1054
        %v1056 = vadd.f32 %v993, %v995
        %1057 = vadd.xlane.f32.xlu0 %v1056
        %v1058 = vpop.xlane.xlu0 %1057
        %v1059 = vadd.f32 %v997, %v999
        %1060 = vadd.xlane.f32.xlu0 %v1059
        %v1061 = vpop.xlane.xlu0 %1060
        %v1062 = vadd.f32 %v1001, %v1003
        %1063 = vadd.xlane.f32.xlu0 %v1062
        %v1064 = vpop.xlane.xlu0 %1063
        %v1065 = vadd.f32 %v1005, %v1007
        %1066 = vadd.xlane.f32.xlu0 %v1065
        %v1067 = vpop.xlane.xlu0 %1066
        %v1068 = vadd.f32 %v1009, %v1011
        %1069 = vadd.xlane.f32.xlu0 %v1068
        %v1070 = vpop.xlane.xlu0 %1069
        %v1071 = vadd.f32 %v1013, %v1015
        %1072 = vadd.xlane.f32.xlu0 %v1071
        %v1073 = vpop.xlane.xlu0 %1072
        %v1074 = vadd.f32 %v1017, %v1019
        %1075 = vadd.xlane.f32.xlu0 %v1074
        %v1076 = vpop.xlane.xlu0 %1075
        %v1077 = vadd.f32 %v1021, %v1023
        %1078 = vadd.xlane.f32.xlu0 %v1077
        %v1079 = vpop.xlane.xlu0 %1078
        %v1080 = vadd.f32 %v1025, %v1027
        %1081 = vadd.xlane.f32.xlu0 %v1080
        %v1082 = vpop.xlane.xlu0 %1081
        %v1083 = vadd.f32 %v1029, %v1031
        %1084 = vadd.xlane.f32.xlu0 %v1083
        %v1085 = vpop.xlane.xlu0 %1084
        %v1086 = vadd.f32 %v1033, %v1035
        %1087 = vadd.xlane.f32.xlu0 %v1086
        %v1088 = vpop.xlane.xlu0 %1087
        %v1089 = vadd.f32 %v1037, %v1039
        %1090 = vadd.xlane.f32.xlu0 %v1089
        %v1091 = vpop.xlane.xlu0 %1090
        %v1092 = vadd.f32 %v1041, %v1043
        %1093 = vadd.xlane.f32.xlu0 %v1092
        %v1094 = vpop.xlane.xlu0 %1093
        %v1095 = vadd.f32 %v1045, %v1047
        %1096 = vadd.xlane.f32.xlu0 %v1095
        %v1097 = vpop.xlane.xlu0 %1096
        %v1098 = vadd.f32 %v1049, %v1051
        %1099 = vadd.xlane.f32.xlu0 %v1098
        %v1100 = vpop.xlane.xlu0 %1099
        %v1101 = vadd.f32 %v1053, %v1055
        %1102 = vadd.xlane.f32.xlu0 %v1101
        %v1103 = vpop.xlane.xlu0 %1102
        %v1104 = vrcp.pop %v1058
        %v1105 = vrcp.pop %v1061
        %v1106 = vrcp.pop %v1064
        %v1107 = vrcp.pop %v1067
        %v1108 = vrcp.pop %v1070
        %v1109 = vrcp.pop %v1073
        %v1110 = vrcp.pop %v1076
        %v1111 = vrcp.pop %v1079
        %v1112 = vrcp.pop %v1082
        %v1113 = vrcp.pop %v1085
        %v1114 = vrcp.pop %v1088
        %v1115 = vrcp.pop %v1091
        %v1116 = vrcp.pop %v1094
        %v1117 = vrcp.pop %v1097
        %v1118 = vrcp.pop %v1100
        %v1119 = vrcp.pop %v1103
        %v1120 = vmul.f32 %v993, %v1104
        %v1121 = vmul.f32 %v995, %v1104
        %v1122 = vmul.f32 %v997, %v1105
        %v1123 = vmul.f32 %v999, %v1105
        %v1124 = vmul.f32 %v1001, %v1106
        %v1125 = vmul.f32 %v1003, %v1106
        %v1126 = vmul.f32 %v1005, %v1107
        %v1127 = vmul.f32 %v1007, %v1107
        %v1128 = vmul.f32 %v1009, %v1108
        %v1129 = vmul.f32 %v1011, %v1108
        %v1130 = vmul.f32 %v1013, %v1109
        %v1131 = vmul.f32 %v1015, %v1109
        %v1132 = vmul.f32 %v1017, %v1110
        %v1133 = vmul.f32 %v1019, %v1110
        %v1134 = vmul.f32 %v1021, %v1111
        %v1135 = vmul.f32 %v1023, %v1111
        %v1136 = vmul.f32 %v1025, %v1112
        %v1137 = vmul.f32 %v1027, %v1112
        %v1138 = vmul.f32 %v1029, %v1113
        %v1139 = vmul.f32 %v1031, %v1113
        %v1140 = vmul.f32 %v1033, %v1114
        %v1141 = vmul.f32 %v1035, %v1114
        %v1142 = vmul.f32 %v1037, %v1115
        %v1143 = vmul.f32 %v1039, %v1115
        %v1144 = vmul.f32 %v1041, %v1116
        %v1145 = vmul.f32 %v1043, %v1116
        %v1146 = vmul.f32 %v1045, %v1117
        %v1147 = vmul.f32 %v1047, %v1117
        %v1148 = vmul.f32 %v1049, %v1118
        %v1149 = vmul.f32 %v1051, %v1118
        %v1150 = vmul.f32 %v1053, %v1119
        %v1151 = vmul.f32 %v1055, %v1119
        %1152 = vmatprep.subr.mxu0 %v1151
        %1153 = vmatpush1.xpose.msra.mxu0 %v1150
        %1154 = vmatprep.subr.mxu0 %v1149
        %1155 = vmatpush1.xpose.msra.mxu0 %v1148
        %1156 = vmatprep.subr.mxu0 %v1147
        %1157 = vmatpush1.xpose.msra.mxu0 %v1146
        %1158 = vmatprep.subr.mxu0 %v1145
        %1159 = vmatpush1.xpose.msra.mxu0 %v1144
        %1160 = vmatprep.subr.mxu0 %v1143
        %1161 = vmatpush1.xpose.msra.mxu0 %v1142
        %1162 = vmatprep.subr.mxu0 %v1141
        %1163 = vmatpush1.xpose.msra.mxu0 %v1140
        %1164 = vmatprep.subr.mxu0 %v1139
        %1165 = vmatpush1.xpose.msra.mxu0 %v1138
        %1166 = vmatprep.subr.mxu0 %v1137
        %1167 = vmatpush1.xpose.msra.mxu0 %v1136
        %1168 = vmatprep.subr.mxu0 %v1135
        %1169 = vmatpush1.xpose.msra.mxu0 %v1134
        %1170 = vmatprep.subr.mxu0 %v1133
        %1171 = vmatpush1.xpose.msra.mxu0 %v1132
        %1172 = vmatprep.subr.mxu0 %v1131
        %1173 = vmatpush1.xpose.msra.mxu0 %v1130
        %1174 = vmatprep.subr.mxu0 %v1129
        %1175 = vmatpush1.xpose.msra.mxu0 %v1128
        %1176 = vmatprep.subr.mxu0 %v1127
        %1177 = vmatpush1.xpose.msra.mxu0 %v1126
        %1178 = vmatprep.subr.mxu0 %v1125
        %1179 = vmatpush1.xpose.msra.mxu0 %v1124
        %1180 = vmatprep.subr.mxu0 %v1123
        %1181 = vmatpush1.xpose.msra.mxu0 %v1122
        %1182 = vmatprep.subr.mxu0 %v1121
        %1183 = vmatpush1.xpose.msra.mxu0 %v1120
        %1184 = vmatprep.subr.mxu0 0.0
        %1185 = vmatpush2.xpose.msra.mxu0 0.0
        %1186 = vmatprep.subr.mxu0 0.0
        %1187 = vmatpush2.xpose.msra.mxu0 0.0
        %1188 = vmatprep.subr.mxu0 0.0
        %1189 = vmatpush2.xpose.msra.mxu0 0.0
        %1190 = vmatprep.subr.mxu0 0.0
        %1191 = vmatpush2.xpose.msra.mxu0 0.0
        %1192 = vmatprep.subr.mxu0 0.0
        %1193 = vmatpush2.xpose.msra.mxu0 0.0
        %1194 = vmatprep.subr.mxu0 0.0
        %1195 = vmatpush2.xpose.msra.mxu0 0.0
        %1196 = vmatprep.subr.mxu0 0.0
        %1197 = vmatpush2.xpose.msra.mxu0 0.0
        %1198 = vmatprep.subr.mxu0 0.0
        %1199 = vmatpush2.xpose.msra.mxu0 0.0
        %1200 = vmatprep.subr.mxu0 0.0
        %1201 = vmatpush2.xpose.msra.mxu0 0.0
        %1202 = vmatprep.subr.mxu0 0.0
        %1203 = vmatpush2.xpose.msra.mxu0 0.0
        %1204 = vmatprep.subr.mxu0 0.0
        %1205 = vmatpush2.xpose.msra.mxu0 0.0
        %1206 = vmatprep.subr.mxu0 0.0
        %1207 = vmatpush2.xpose.msra.mxu0 0.0
        %1208 = vmatprep.subr.mxu0 0.0
        %1209 = vmatpush2.xpose.msra.mxu0 0.0
        %1210 = vmatprep.subr.mxu0 0.0
        %1211 = vmatpush2.xpose.msra.mxu0 0.0
        %1212 = vmatprep.subr.mxu0 0.0
        %1213 = vmatpush2.xpose.msra.mxu0 0.0
        %1214 = vmatprep.subr.mxu0 0.0
        %1215 = vmatpush2.xpose.msra.mxu0 0.0
        %1216 = vmatprep.mubr.f32.mxu0 %v548
        %1217 = vmatmul.mubr.f32.gmra.mxu0 %v546
        %v1218 = vpop.f32.mrf.mxu0
        %v1219 = vadd.f32 0.0, %v1218
        %v1220 = vpop.f32.mrf.mxu0
        %1221 = vdwg.mxu0
        %s1222 = scalar_lea.vmem %s381, 256 [#allocation2]
        %v1223 = vld [vmem:[%s1222] sm:$0xff]
        %v1224 = vld [vmem:[%s1222 + $0x8] sm:$0xff]
        %v1225 = vld [vmem:[%s1222 + $0x10] sm:$0xff]
        %v1226 = vld [vmem:[%s1222 + $0x18] sm:$0xff]
        %v1227 = vld [vmem:[%s1222 + $0x20] sm:$0xff]
        %v1228 = vld [vmem:[%s1222 + $0x28] sm:$0xff]
        %v1229 = vld [vmem:[%s1222 + $0x30] sm:$0xff]
        %v1230 = vld [vmem:[%s1222 + $0x38] sm:$0xff]
        %v1231 = vld [vmem:[%s1222 + $0x40] sm:$0xff]
        %v1232 = vld [vmem:[%s1222 + $0x48] sm:$0xff]
        %v1233 = vld [vmem:[%s1222 + $0x50] sm:$0xff]
        %v1234 = vld [vmem:[%s1222 + $0x58] sm:$0xff]
        %v1235 = vld [vmem:[%s1222 + $0x60] sm:$0xff]
        %v1236 = vld [vmem:[%s1222 + $0x68] sm:$0xff]
        %v1237 = vld [vmem:[%s1222 + $0x70] sm:$0xff]
        %v1238 = vld [vmem:[%s1222 + $0x78] sm:$0xff]
        %v1239 = vld [vmem:[%s1222 + $0x80] sm:$0xff]
        %v1240 = vld [vmem:[%s1222 + $0x88] sm:$0xff]
        %v1241 = vld [vmem:[%s1222 + $0x90] sm:$0xff]
        %v1242 = vld [vmem:[%s1222 + $0x98] sm:$0xff]
        %v1243 = vld [vmem:[%s1222 + $0xa0] sm:$0xff]
        %v1244 = vld [vmem:[%s1222 + $0xa8] sm:$0xff]
        %v1245 = vld [vmem:[%s1222 + $0xb0] sm:$0xff]
        %v1246 = vld [vmem:[%s1222 + $0xb8] sm:$0xff]
        %v1247 = vld [vmem:[%s1222 + $0xc0] sm:$0xff]
        %v1248 = vld [vmem:[%s1222 + $0xc8] sm:$0xff]
        %v1249 = vld [vmem:[%s1222 + $0xd0] sm:$0xff]
        %v1250 = vld [vmem:[%s1222 + $0xd8] sm:$0xff]
        %v1251 = vld [vmem:[%s1222 + $0xe0] sm:$0xff]
        %v1252 = vld [vmem:[%s1222 + $0xe8] sm:$0xff]
        %v1253 = vld [vmem:[%s1222 + $0xf0] sm:$0xff]
        %v1254 = vld [vmem:[%s1222 + $0xf8] sm:$0xff]
        %v1256 = vrot.slane %v630, 4
        %1258 = vxpose.xlu0.b32.start [1/16] %v1256, 128
        %1259 = vxpose.xlu0.b32.cont [2/16] 0.0, 128
        %1260 = vxpose.xlu0.b32.cont [3/16] 0.0, 128
        %1261 = vxpose.xlu0.b32.cont [4/16] 0.0, 128
        %1262 = vxpose.xlu0.b32.cont [5/16] 0.0, 128
        %1263 = vxpose.xlu0.b32.cont [6/16] 0.0, 128
        %1264 = vxpose.xlu0.b32.cont [7/16] 0.0, 128
        %1265 = vxpose.xlu0.b32.cont [8/16] 0.0, 128
        %1266 = vxpose.xlu0.b32.cont [9/16] 0.0, 128
        %1267 = vxpose.xlu0.b32.cont [10/16] 0.0, 128
        %1268 = vxpose.xlu0.b32.cont [11/16] 0.0, 128
        %1269 = vxpose.xlu0.b32.cont [12/16] 0.0, 128
        %1270 = vxpose.xlu0.b32.cont [13/16] 0.0, 128
        %1271 = vxpose.xlu0.b32.cont [14/16] 0.0, 128
        %1272 = vxpose.xlu0.b32.cont [15/16] 0.0, 128
        %1273 = vxpose.xlu0.b32.end [16/16] 0.0, 128
        %v1274 = vpop.trf.xlu0
        %v1275 = vpop.trf.xlu0
        %v1276 = vpop.trf.xlu0
        %v1277 = vpop.trf.xlu0
        %v1278 = vpop.trf.xlu0
        %v1279 = vpop.trf.xlu0
        %v1280 = vpop.trf.xlu0
        %v1281 = vpop.trf.xlu0
        %v1282 = vpop.trf.xlu0
        %v1283 = vpop.trf.xlu0
        %v1284 = vpop.trf.xlu0
        %v1285 = vpop.trf.xlu0
        %v1286 = vpop.trf.xlu0
        %v1287 = vpop.trf.xlu0
        %v1288 = vpop.trf.xlu0
        %v1289 = vpop.trf.xlu0
        %v1290 = vrot.slane %v540, 4
        %v1291 = vrot.slane %v542, 4
        %v1293 = vsel %vm461, %v1274, 0
        %v1296 = vsel %vm461, %v1275, 0
        %v1299 = vsel %vm461, %v1276, 0
        %v1302 = vsel %vm461, %v1277, 0
        %v1305 = vsel %vm461, %v1278, 0
        %v1308 = vsel %vm461, %v1279, 0
        %v1311 = vsel %vm461, %v1280, 0
        %v1314 = vsel %vm461, %v1281, 0
        %v1317 = vsel %vm461, %v1282, 0
        %v1320 = vsel %vm461, %v1283, 0
        %v1323 = vsel %vm461, %v1284, 0
        %v1326 = vsel %vm461, %v1285, 0
        %v1329 = vsel %vm461, %v1286, 0
        %v1332 = vsel %vm461, %v1287, 0
        %v1335 = vsel %vm461, %v1288, 0
        %v1338 = vsel %vm461, %v1289, 0
        %v1340 = vsel %vm468, %v1290, 0
        %v1342 = vsel %vm468, %v1291, 0
        %1344 = vmatprep.subr.mxu0 0.0
        %1345 = vmatpush1.msra.mxu0 0.0
        %1346 = vmatprep.subr.mxu0 0.0
        %1347 = vmatpush1.msra.mxu0 0.0
        %1348 = vmatprep.subr.mxu0 0.0
        %1349 = vmatpush1.msra.mxu0 0.0
        %1350 = vmatprep.subr.mxu0 0.0
        %1351 = vmatpush1.msra.mxu0 0.0
        %1352 = vmatprep.subr.mxu0 0.0
        %1353 = vmatpush1.msra.mxu0 0.0
        %1354 = vmatprep.subr.mxu0 0.0
        %1355 = vmatpush1.msra.mxu0 0.0
        %1356 = vmatprep.subr.mxu0 0.0
        %1357 = vmatpush1.msra.mxu0 0.0
        %1358 = vmatprep.subr.mxu0 0.0
        %1359 = vmatpush1.msra.mxu0 0.0
        %1360 = vmatprep.subr.mxu0 0.0
        %1361 = vmatpush1.msra.mxu0 0.0
        %1362 = vmatprep.subr.mxu0 0.0
        %1363 = vmatpush1.msra.mxu0 0.0
        %1364 = vmatprep.subr.mxu0 0.0
        %1365 = vmatpush1.msra.mxu0 0.0
        %1366 = vmatprep.subr.mxu0 0.0
        %1367 = vmatpush1.msra.mxu0 0.0
        %1368 = vmatprep.subr.mxu0 0.0
        %1369 = vmatpush1.msra.mxu0 0.0
        %1370 = vmatprep.subr.mxu0 0.0
        %1371 = vmatpush1.msra.mxu0 0.0
        %1372 = vmatprep.subr.mxu0 0.0
        %1373 = vmatpush1.msra.mxu0 0.0
        %1374 = vmatprep.subr.mxu0 %v1342
        %1375 = vmatpush1.msra.mxu0 %v1340
        %1376 = vmatprep.subr.mxu0 0.0
        %1377 = vmatpush2.msra.mxu0 0.0
        %1378 = vmatprep.subr.mxu0 0.0
        %1379 = vmatpush2.msra.mxu0 0.0
        %1380 = vmatprep.subr.mxu0 0.0
        %1381 = vmatpush2.msra.mxu0 0.0
        %1382 = vmatprep.subr.mxu0 0.0
        %1383 = vmatpush2.msra.mxu0 0.0
        %1384 = vmatprep.subr.mxu0 0.0
        %1385 = vmatpush2.msra.mxu0 0.0
        %1386 = vmatprep.subr.mxu0 0.0
        %1387 = vmatpush2.msra.mxu0 0.0
        %1388 = vmatprep.subr.mxu0 0.0
        %1389 = vmatpush2.msra.mxu0 0.0
        %1390 = vmatprep.subr.mxu0 0.0
        %1391 = vmatpush2.msra.mxu0 0.0
        %1392 = vmatprep.subr.mxu0 0.0
        %1393 = vmatpush2.msra.mxu0 0.0
        %1394 = vmatprep.subr.mxu0 0.0
        %1395 = vmatpush2.msra.mxu0 0.0
        %1396 = vmatprep.subr.mxu0 0.0
        %1397 = vmatpush2.msra.mxu0 0.0
        %1398 = vmatprep.subr.mxu0 0.0
        %1399 = vmatpush2.msra.mxu0 0.0
        %1400 = vmatprep.subr.mxu0 0.0
        %1401 = vmatpush2.msra.mxu0 0.0
        %1402 = vmatprep.subr.mxu0 0.0
        %1403 = vmatpush2.msra.mxu0 0.0
        %1404 = vmatprep.subr.mxu0 0.0
        %1405 = vmatpush2.msra.mxu0 0.0
        %1406 = vmatprep.subr.mxu0 0.0
        %1407 = vmatpush2.msra.mxu0 0.0
        %1408 = vmatprep.mubr.f32.mxu0 0.0
        %1409 = vmatmul.mubr.f32.gmra.mxu0 %v1293
        %v1410 = vpop.f32.mrf.mxu0
        %v1411 = vadd.f32 %v1223, %v1410
        %v1412 = vpop.f32.mrf.mxu0
        %v1413 = vadd.f32 %v1224, %v1412
        %1414 = vmatprep.mubr.f32.mxu0 0.0
        %1415 = vmatmul.mubr.f32.gmra.mxu0 %v1296
        %v1416 = vpop.f32.mrf.mxu0
        %v1417 = vadd.f32 %v1225, %v1416
        %v1418 = vpop.f32.mrf.mxu0
        %v1419 = vadd.f32 %v1226, %v1418
        %1420 = vmatprep.mubr.f32.mxu0 0.0
        %1421 = vmatmul.mubr.f32.gmra.mxu0 %v1299
        %v1422 = vpop.f32.mrf.mxu0
        %v1423 = vadd.f32 %v1227, %v1422
        %v1424 = vpop.f32.mrf.mxu0
        %v1425 = vadd.f32 %v1228, %v1424
        %1426 = vmatprep.mubr.f32.mxu0 0.0
        %1427 = vmatmul.mubr.f32.gmra.mxu0 %v1302
        %v1428 = vpop.f32.mrf.mxu0
        %v1429 = vadd.f32 %v1229, %v1428
        %v1430 = vpop.f32.mrf.mxu0
        %v1431 = vadd.f32 %v1230, %v1430
        %1432 = vmatprep.mubr.f32.mxu0 0.0
        %1433 = vmatmul.mubr.f32.gmra.mxu0 %v1305
        %v1434 = vpop.f32.mrf.mxu0
        %v1435 = vadd.f32 %v1231, %v1434
        %v1436 = vpop.f32.mrf.mxu0
        %v1437 = vadd.f32 %v1232, %v1436
        %1438 = vmatprep.mubr.f32.mxu0 0.0
        %1439 = vmatmul.mubr.f32.gmra.mxu0 %v1308
        %v1440 = vpop.f32.mrf.mxu0
        %v1441 = vadd.f32 %v1233, %v1440
        %v1442 = vpop.f32.mrf.mxu0
        %v1443 = vadd.f32 %v1234, %v1442
        %1444 = vmatprep.mubr.f32.mxu0 0.0
        %1445 = vmatmul.mubr.f32.gmra.mxu0 %v1311
        %v1446 = vpop.f32.mrf.mxu0
        %v1447 = vadd.f32 %v1235, %v1446
        %v1448 = vpop.f32.mrf.mxu0
        %v1449 = vadd.f32 %v1236, %v1448
        %1450 = vmatprep.mubr.f32.mxu0 0.0
        %1451 = vmatmul.mubr.f32.gmra.mxu0 %v1314
        %v1452 = vpop.f32.mrf.mxu0
        %v1453 = vadd.f32 %v1237, %v1452
        %v1454 = vpop.f32.mrf.mxu0
        %v1455 = vadd.f32 %v1238, %v1454
        %1456 = vmatprep.mubr.f32.mxu0 0.0
        %1457 = vmatmul.mubr.f32.gmra.mxu0 %v1317
        %v1458 = vpop.f32.mrf.mxu0
        %v1459 = vadd.f32 %v1239, %v1458
        %v1460 = vpop.f32.mrf.mxu0
        %v1461 = vadd.f32 %v1240, %v1460
        %1462 = vmatprep.mubr.f32.mxu0 0.0
        %1463 = vmatmul.mubr.f32.gmra.mxu0 %v1320
        %v1464 = vpop.f32.mrf.mxu0
        %v1465 = vadd.f32 %v1241, %v1464
        %v1466 = vpop.f32.mrf.mxu0
        %v1467 = vadd.f32 %v1242, %v1466
        %1468 = vmatprep.mubr.f32.mxu0 0.0
        %1469 = vmatmul.mubr.f32.gmra.mxu0 %v1323
        %v1470 = vpop.f32.mrf.mxu0
        %v1471 = vadd.f32 %v1243, %v1470
        %v1472 = vpop.f32.mrf.mxu0
        %v1473 = vadd.f32 %v1244, %v1472
        %1474 = vmatprep.mubr.f32.mxu0 0.0
        %1475 = vmatmul.mubr.f32.gmra.mxu0 %v1326
        %v1476 = vpop.f32.mrf.mxu0
        %v1477 = vadd.f32 %v1245, %v1476
        %v1478 = vpop.f32.mrf.mxu0
        %v1479 = vadd.f32 %v1246, %v1478
        %1480 = vmatprep.mubr.f32.mxu0 0.0
        %1481 = vmatmul.mubr.f32.gmra.mxu0 %v1329
        %v1482 = vpop.f32.mrf.mxu0
        %v1483 = vadd.f32 %v1247, %v1482
        %v1484 = vpop.f32.mrf.mxu0
        %v1485 = vadd.f32 %v1248, %v1484
        %1486 = vmatprep.mubr.f32.mxu0 0.0
        %1487 = vmatmul.mubr.f32.gmra.mxu0 %v1332
        %v1488 = vpop.f32.mrf.mxu0
        %v1489 = vadd.f32 %v1249, %v1488
        %v1490 = vpop.f32.mrf.mxu0
        %v1491 = vadd.f32 %v1250, %v1490
        %1492 = vmatprep.mubr.f32.mxu0 0.0
        %1493 = vmatmul.mubr.f32.gmra.mxu0 %v1335
        %v1494 = vpop.f32.mrf.mxu0
        %v1495 = vadd.f32 %v1251, %v1494
        %v1496 = vpop.f32.mrf.mxu0
        %v1497 = vadd.f32 %v1252, %v1496
        %1498 = vmatprep.mubr.f32.mxu0 0.0
        %1499 = vmatmul.mubr.f32.gmra.mxu0 %v1338
        %v1500 = vpop.f32.mrf.mxu0
        %v1501 = vadd.f32 %v1253, %v1500
        %v1502 = vpop.f32.mrf.mxu0
        %v1503 = vadd.f32 %v1254, %v1502
        %1504 = vdwg.mxu0
        %v1505 = vmax.f32 %v1411, %v1413
        %1506 = vmax.xlane.f32.xlu0 %v1505
        %v1507 = vpop.xlane.xlu0 %1506
        %v1508 = vmax.f32 %v1417, %v1419
        %1509 = vmax.xlane.f32.xlu0 %v1508
        %v1510 = vpop.xlane.xlu0 %1509
        %v1511 = vmax.f32 %v1423, %v1425
        %1512 = vmax.xlane.f32.xlu0 %v1511
        %v1513 = vpop.xlane.xlu0 %1512
        %v1514 = vmax.f32 %v1429, %v1431
        %1515 = vmax.xlane.f32.xlu0 %v1514
        %v1516 = vpop.xlane.xlu0 %1515
        %v1517 = vmax.f32 %v1435, %v1437
        %1518 = vmax.xlane.f32.xlu0 %v1517
        %v1519 = vpop.xlane.xlu0 %1518
        %v1520 = vmax.f32 %v1441, %v1443
        %1521 = vmax.xlane.f32.xlu0 %v1520
        %v1522 = vpop.xlane.xlu0 %1521
        %v1523 = vmax.f32 %v1447, %v1449
        %1524 = vmax.xlane.f32.xlu0 %v1523
        %v1525 = vpop.xlane.xlu0 %1524
        %v1526 = vmax.f32 %v1453, %v1455
        %1527 = vmax.xlane.f32.xlu0 %v1526
        %v1528 = vpop.xlane.xlu0 %1527
        %v1529 = vmax.f32 %v1459, %v1461
        %1530 = vmax.xlane.f32.xlu0 %v1529
        %v1531 = vpop.xlane.xlu0 %1530
        %v1532 = vmax.f32 %v1465, %v1467
        %1533 = vmax.xlane.f32.xlu0 %v1532
        %v1534 = vpop.xlane.xlu0 %1533
        %v1535 = vmax.f32 %v1471, %v1473
        %1536 = vmax.xlane.f32.xlu0 %v1535
        %v1537 = vpop.xlane.xlu0 %1536
        %v1538 = vmax.f32 %v1477, %v1479
        %1539 = vmax.xlane.f32.xlu0 %v1538
        %v1540 = vpop.xlane.xlu0 %1539
        %v1541 = vmax.f32 %v1483, %v1485
        %1542 = vmax.xlane.f32.xlu0 %v1541
        %v1543 = vpop.xlane.xlu0 %1542
        %v1544 = vmax.f32 %v1489, %v1491
        %1545 = vmax.xlane.f32.xlu0 %v1544
        %v1546 = vpop.xlane.xlu0 %1545
        %v1547 = vmax.f32 %v1495, %v1497
        %1548 = vmax.xlane.f32.xlu0 %v1547
        %v1549 = vpop.xlane.xlu0 %1548
        %v1550 = vmax.f32 %v1501, %v1503
        %1551 = vmax.xlane.f32.xlu0 %v1550
        %v1552 = vpop.xlane.xlu0 %1551
        %v1553 = vsub.f32 %v1411, %v1507
        %v1554 = vsub.f32 %v1413, %v1507
        %v1555 = vsub.f32 %v1417, %v1510
        %v1556 = vsub.f32 %v1419, %v1510
        %v1557 = vsub.f32 %v1423, %v1513
        %v1558 = vsub.f32 %v1425, %v1513
        %v1559 = vsub.f32 %v1429, %v1516
        %v1560 = vsub.f32 %v1431, %v1516
        %v1561 = vsub.f32 %v1435, %v1519
        %v1562 = vsub.f32 %v1437, %v1519
        %v1563 = vsub.f32 %v1441, %v1522
        %v1564 = vsub.f32 %v1443, %v1522
        %v1565 = vsub.f32 %v1447, %v1525
        %v1566 = vsub.f32 %v1449, %v1525
        %v1567 = vsub.f32 %v1453, %v1528
        %v1568 = vsub.f32 %v1455, %v1528
        %v1569 = vsub.f32 %v1459, %v1531
        %v1570 = vsub.f32 %v1461, %v1531
        %v1571 = vsub.f32 %v1465, %v1534
        %v1572 = vsub.f32 %v1467, %v1534
        %v1573 = vsub.f32 %v1471, %v1537
        %v1574 = vsub.f32 %v1473, %v1537
        %v1575 = vsub.f32 %v1477, %v1540
        %v1576 = vsub.f32 %v1479, %v1540
        %v1577 = vsub.f32 %v1483, %v1543
        %v1578 = vsub.f32 %v1485, %v1543
        %v1579 = vsub.f32 %v1489, %v1546
        %v1580 = vsub.f32 %v1491, %v1546
        %v1581 = vsub.f32 %v1495, %v1549
        %v1582 = vsub.f32 %v1497, %v1549
        %v1583 = vsub.f32 %v1501, %v1552
        %v1584 = vsub.f32 %v1503, %v1552
        %v1585 = vmul.f32 %v1553, 1.442695
        %v1586 = vpow.pop %v1585
        %v1587 = vmul.f32 %v1554, 1.442695
        %v1588 = vpow.pop %v1587
        %v1589 = vmul.f32 %v1555, 1.442695
        %v1590 = vpow.pop %v1589
        %v1591 = vmul.f32 %v1556, 1.442695
        %v1592 = vpow.pop %v1591
        %v1593 = vmul.f32 %v1557, 1.442695
        %v1594 = vpow.pop %v1593
        %v1595 = vmul.f32 %v1558, 1.442695
        %v1596 = vpow.pop %v1595
        %v1597 = vmul.f32 %v1559, 1.442695
        %v1598 = vpow.pop %v1597
        %v1599 = vmul.f32 %v1560, 1.442695
        %v1600 = vpow.pop %v1599
        %v1601 = vmul.f32 %v1561, 1.442695
        %v1602 = vpow.pop %v1601
        %v1603 = vmul.f32 %v1562, 1.442695
        %v1604 = vpow.pop %v1603
        %v1605 = vmul.f32 %v1563, 1.442695
        %v1606 = vpow.pop %v1605
        %v1607 = vmul.f32 %v1564, 1.442695
        %v1608 = vpow.pop %v1607
        %v1609 = vmul.f32 %v1565, 1.442695
        %v1610 = vpow.pop %v1609
        %v1611 = vmul.f32 %v1566, 1.442695
        %v1612 = vpow.pop %v1611
        %v1613 = vmul.f32 %v1567, 1.442695
        %v1614 = vpow.pop %v1613
        %v1615 = vmul.f32 %v1568, 1.442695
        %v1616 = vpow.pop %v1615
        %v1617 = vmul.f32 %v1569, 1.442695
        %v1618 = vpow.pop %v1617
        %v1619 = vmul.f32 %v1570, 1.442695
        %v1620 = vpow.pop %v1619
        %v1621 = vmul.f32 %v1571, 1.442695
        %v1622 = vpow.pop %v1621
        %v1623 = vmul.f32 %v1572, 1.442695
        %v1624 = vpow.pop %v1623
        %v1625 = vmul.f32 %v1573, 1.442695
        %v1626 = vpow.pop %v1625
        %v1627 = vmul.f32 %v1574, 1.442695
        %v1628 = vpow.pop %v1627
        %v1629 = vmul.f32 %v1575, 1.442695
        %v1630 = vpow.pop %v1629
        %v1631 = vmul.f32 %v1576, 1.442695
        %v1632 = vpow.pop %v1631
        %v1633 = vmul.f32 %v1577, 1.442695
        %v1634 = vpow.pop %v1633
        %v1635 = vmul.f32 %v1578, 1.442695
        %v1636 = vpow.pop %v1635
        %v1637 = vmul.f32 %v1579, 1.442695
        %v1638 = vpow.pop %v1637
        %v1639 = vmul.f32 %v1580, 1.442695
        %v1640 = vpow.pop %v1639
        %v1641 = vmul.f32 %v1581, 1.442695
        %v1642 = vpow.pop %v1641
        %v1643 = vmul.f32 %v1582, 1.442695
        %v1644 = vpow.pop %v1643
        %v1645 = vmul.f32 %v1583, 1.442695
        %v1646 = vpow.pop %v1645
        %v1647 = vmul.f32 %v1584, 1.442695
        %v1648 = vpow.pop %v1647
        %v1649 = vadd.f32 %v1586, %v1588
        %1650 = vadd.xlane.f32.xlu0 %v1649
        %v1651 = vpop.xlane.xlu0 %1650
        %v1652 = vadd.f32 %v1590, %v1592
        %1653 = vadd.xlane.f32.xlu0 %v1652
        %v1654 = vpop.xlane.xlu0 %1653
        %v1655 = vadd.f32 %v1594, %v1596
        %1656 = vadd.xlane.f32.xlu0 %v1655
        %v1657 = vpop.xlane.xlu0 %1656
        %v1658 = vadd.f32 %v1598, %v1600
        %1659 = vadd.xlane.f32.xlu0 %v1658
        %v1660 = vpop.xlane.xlu0 %1659
        %v1661 = vadd.f32 %v1602, %v1604
        %1662 = vadd.xlane.f32.xlu0 %v1661
        %v1663 = vpop.xlane.xlu0 %1662
        %v1664 = vadd.f32 %v1606, %v1608
        %1665 = vadd.xlane.f32.xlu0 %v1664
        %v1666 = vpop.xlane.xlu0 %1665
        %v1667 = vadd.f32 %v1610, %v1612
        %1668 = vadd.xlane.f32.xlu0 %v1667
        %v1669 = vpop.xlane.xlu0 %1668
        %v1670 = vadd.f32 %v1614, %v1616
        %1671 = vadd.xlane.f32.xlu0 %v1670
        %v1672 = vpop.xlane.xlu0 %1671
        %v1673 = vadd.f32 %v1618, %v1620
        %1674 = vadd.xlane.f32.xlu0 %v1673
        %v1675 = vpop.xlane.xlu0 %1674
        %v1676 = vadd.f32 %v1622, %v1624
        %1677 = vadd.xlane.f32.xlu0 %v1676
        %v1678 = vpop.xlane.xlu0 %1677
        %v1679 = vadd.f32 %v1626, %v1628
        %1680 = vadd.xlane.f32.xlu0 %v1679
        %v1681 = vpop.xlane.xlu0 %1680
        %v1682 = vadd.f32 %v1630, %v1632
        %1683 = vadd.xlane.f32.xlu0 %v1682
        %v1684 = vpop.xlane.xlu0 %1683
        %v1685 = vadd.f32 %v1634, %v1636
        %1686 = vadd.xlane.f32.xlu0 %v1685
        %v1687 = vpop.xlane.xlu0 %1686
        %v1688 = vadd.f32 %v1638, %v1640
        %1689 = vadd.xlane.f32.xlu0 %v1688
        %v1690 = vpop.xlane.xlu0 %1689
        %v1691 = vadd.f32 %v1642, %v1644
        %1692 = vadd.xlane.f32.xlu0 %v1691
        %v1693 = vpop.xlane.xlu0 %1692
        %v1694 = vadd.f32 %v1646, %v1648
        %1695 = vadd.xlane.f32.xlu0 %v1694
        %v1696 = vpop.xlane.xlu0 %1695
        %v1697 = vrcp.pop %v1651
        %v1698 = vrcp.pop %v1654
        %v1699 = vrcp.pop %v1657
        %v1700 = vrcp.pop %v1660
        %v1701 = vrcp.pop %v1663
        %v1702 = vrcp.pop %v1666
        %v1703 = vrcp.pop %v1669
        %v1704 = vrcp.pop %v1672
        %v1705 = vrcp.pop %v1675
        %v1706 = vrcp.pop %v1678
        %v1707 = vrcp.pop %v1681
        %v1708 = vrcp.pop %v1684
        %v1709 = vrcp.pop %v1687
        %v1710 = vrcp.pop %v1690
        %v1711 = vrcp.pop %v1693
        %v1712 = vrcp.pop %v1696
        %v1713 = vmul.f32 %v1586, %v1697
        %v1714 = vmul.f32 %v1588, %v1697
        %v1715 = vmul.f32 %v1590, %v1698
        %v1716 = vmul.f32 %v1592, %v1698
        %v1717 = vmul.f32 %v1594, %v1699
        %v1718 = vmul.f32 %v1596, %v1699
        %v1719 = vmul.f32 %v1598, %v1700
        %v1720 = vmul.f32 %v1600, %v1700
        %v1721 = vmul.f32 %v1602, %v1701
        %v1722 = vmul.f32 %v1604, %v1701
        %v1723 = vmul.f32 %v1606, %v1702
        %v1724 = vmul.f32 %v1608, %v1702
        %v1725 = vmul.f32 %v1610, %v1703
        %v1726 = vmul.f32 %v1612, %v1703
        %v1727 = vmul.f32 %v1614, %v1704
        %v1728 = vmul.f32 %v1616, %v1704
        %v1729 = vmul.f32 %v1618, %v1705
        %v1730 = vmul.f32 %v1620, %v1705
        %v1731 = vmul.f32 %v1622, %v1706
        %v1732 = vmul.f32 %v1624, %v1706
        %v1733 = vmul.f32 %v1626, %v1707
        %v1734 = vmul.f32 %v1628, %v1707
        %v1735 = vmul.f32 %v1630, %v1708
        %v1736 = vmul.f32 %v1632, %v1708
        %v1737 = vmul.f32 %v1634, %v1709
        %v1738 = vmul.f32 %v1636, %v1709
        %v1739 = vmul.f32 %v1638, %v1710
        %v1740 = vmul.f32 %v1640, %v1710
        %v1741 = vmul.f32 %v1642, %v1711
        %v1742 = vmul.f32 %v1644, %v1711
        %v1743 = vmul.f32 %v1646, %v1712
        %v1744 = vmul.f32 %v1648, %v1712
        %v1747 = vrot.slane %v546, 4
        %v1748 = vrot.slane %v548, 4
        %1751 = vmatprep.subr.mxu0 %v1744
        %1752 = vmatpush1.xpose.msra.mxu0 %v1743
        %1753 = vmatprep.subr.mxu0 %v1742
        %1754 = vmatpush1.xpose.msra.mxu0 %v1741
        %1755 = vmatprep.subr.mxu0 %v1740
        %1756 = vmatpush1.xpose.msra.mxu0 %v1739
        %1757 = vmatprep.subr.mxu0 %v1738
        %1758 = vmatpush1.xpose.msra.mxu0 %v1737
        %1759 = vmatprep.subr.mxu0 %v1736
        %1760 = vmatpush1.xpose.msra.mxu0 %v1735
        %1761 = vmatprep.subr.mxu0 %v1734
        %1762 = vmatpush1.xpose.msra.mxu0 %v1733
        %1763 = vmatprep.subr.mxu0 %v1732
        %1764 = vmatpush1.xpose.msra.mxu0 %v1731
        %1765 = vmatprep.subr.mxu0 %v1730
        %1766 = vmatpush1.xpose.msra.mxu0 %v1729
        %1767 = vmatprep.subr.mxu0 %v1728
        %1768 = vmatpush1.xpose.msra.mxu0 %v1727
        %1769 = vmatprep.subr.mxu0 %v1726
        %1770 = vmatpush1.xpose.msra.mxu0 %v1725
        %1771 = vmatprep.subr.mxu0 %v1724
        %1772 = vmatpush1.xpose.msra.mxu0 %v1723
        %1773 = vmatprep.subr.mxu0 %v1722
        %1774 = vmatpush1.xpose.msra.mxu0 %v1721
        %1775 = vmatprep.subr.mxu0 %v1720
        %1776 = vmatpush1.xpose.msra.mxu0 %v1719
        %1777 = vmatprep.subr.mxu0 %v1718
        %1778 = vmatpush1.xpose.msra.mxu0 %v1717
        %1779 = vmatprep.subr.mxu0 %v1716
        %1780 = vmatpush1.xpose.msra.mxu0 %v1715
        %1781 = vmatprep.subr.mxu0 %v1714
        %1782 = vmatpush1.xpose.msra.mxu0 %v1713
        %1783 = vmatprep.subr.mxu0 0.0
        %1784 = vmatpush2.xpose.msra.mxu0 0.0
        %1785 = vmatprep.subr.mxu0 0.0
        %1786 = vmatpush2.xpose.msra.mxu0 0.0
        %1787 = vmatprep.subr.mxu0 0.0
        %1788 = vmatpush2.xpose.msra.mxu0 0.0
        %1789 = vmatprep.subr.mxu0 0.0
        %1790 = vmatpush2.xpose.msra.mxu0 0.0
        %1791 = vmatprep.subr.mxu0 0.0
        %1792 = vmatpush2.xpose.msra.mxu0 0.0
        %1793 = vmatprep.subr.mxu0 0.0
        %1794 = vmatpush2.xpose.msra.mxu0 0.0
        %1795 = vmatprep.subr.mxu0 0.0
        %1796 = vmatpush2.xpose.msra.mxu0 0.0
        %1797 = vmatprep.subr.mxu0 0.0
        %1798 = vmatpush2.xpose.msra.mxu0 0.0
        %1799 = vmatprep.subr.mxu0 0.0
        %1800 = vmatpush2.xpose.msra.mxu0 0.0
        %1801 = vmatprep.subr.mxu0 0.0
        %1802 = vmatpush2.xpose.msra.mxu0 0.0
        %1803 = vmatprep.subr.mxu0 0.0
        %1804 = vmatpush2.xpose.msra.mxu0 0.0
        %1805 = vmatprep.subr.mxu0 0.0
        %1806 = vmatpush2.xpose.msra.mxu0 0.0
        %1807 = vmatprep.subr.mxu0 0.0
        %1808 = vmatpush2.xpose.msra.mxu0 0.0
        %1809 = vmatprep.subr.mxu0 0.0
        %1810 = vmatpush2.xpose.msra.mxu0 0.0
        %1811 = vmatprep.subr.mxu0 0.0
        %1812 = vmatpush2.xpose.msra.mxu0 0.0
        %1813 = vmatprep.subr.mxu0 0.0
        %1814 = vmatpush2.xpose.msra.mxu0 0.0
        %1815 = vmatprep.mubr.f32.mxu0 %v1748
        %1816 = vmatmul.mubr.f32.gmra.mxu0 %v1747
        %v1817 = vpop.f32.mrf.mxu0
        %v1818 = vadd.f32 0.0, %v1817
        %v1819 = vpop.f32.mrf.mxu0
        %1820 = vdwg.mxu0
        %v1822 = vrot.slane %v1818, 4
        %v1824 = vsel %vm468, %v1219, %v1822
        %v1825 = vld [vmem:[%s7] sm:$0xff]
        %v1826 = vld [vmem:[%s8] sm:$0xff]
        %1828 = vset.pattern.permute.xlu0 0
        %1829 = vperm.xlu0 %1828, %v1826
        %v1830 = vpop.permute.xlu0 %1829
        %vm1832 = vcmask 64512
        %v1834 = vsel %vm1832, %v1825, 0
        %1836 = vmatprep.subr.mxu0 0.0
        %1837 = vmatpush1.msra.mxu0 0.0
        %1838 = vmatprep.subr.mxu0 0.0
        %1839 = vmatpush1.msra.mxu0 0.0
        %1840 = vmatprep.subr.mxu0 0.0
        %1841 = vmatpush1.msra.mxu0 0.0
        %1842 = vmatprep.subr.mxu0 0.0
        %1843 = vmatpush1.msra.mxu0 0.0
        %1844 = vmatprep.subr.mxu0 0.0
        %1845 = vmatpush1.msra.mxu0 0.0
        %1846 = vmatprep.subr.mxu0 0.0
        %1847 = vmatpush1.msra.mxu0 0.0
        %1848 = vmatprep.subr.mxu0 0.0
        %1849 = vmatpush1.msra.mxu0 0.0
        %1850 = vmatprep.subr.mxu0 0.0
        %1851 = vmatpush1.msra.mxu0 0.0
        %1852 = vmatprep.subr.mxu0 0.0
        %1853 = vmatpush1.msra.mxu0 0.0
        %1854 = vmatprep.subr.mxu0 0.0
        %1855 = vmatpush1.msra.mxu0 0.0
        %1856 = vmatprep.subr.mxu0 0.0
        %1857 = vmatpush1.msra.mxu0 0.0
        %1858 = vmatprep.subr.mxu0 0.0
        %1859 = vmatpush1.msra.mxu0 0.0
        %1860 = vmatprep.subr.mxu0 0.0
        %1861 = vmatpush1.msra.mxu0 0.0
        %1862 = vmatprep.subr.mxu0 0.0
        %1863 = vmatpush1.msra.mxu0 0.0
        %1864 = vmatprep.subr.mxu0 0.0
        %1865 = vmatpush1.msra.mxu0 0.0
        %1866 = vmatprep.subr.mxu0 0.0
        %1867 = vmatpush1.msra.mxu0 %v1824
        %1868 = vmatprep.subr.mxu0 0.0
        %1869 = vmatpush2.msra.mxu0 0.0
        %1870 = vmatprep.subr.mxu0 0.0
        %1871 = vmatpush2.msra.mxu0 0.0
        %1872 = vmatprep.subr.mxu0 0.0
        %1873 = vmatpush2.msra.mxu0 0.0
        %1874 = vmatprep.subr.mxu0 0.0
        %1875 = vmatpush2.msra.mxu0 0.0
        %1876 = vmatprep.subr.mxu0 0.0
        %1877 = vmatpush2.msra.mxu0 0.0
        %1878 = vmatprep.subr.mxu0 0.0
        %1879 = vmatpush2.msra.mxu0 0.0
        %1880 = vmatprep.subr.mxu0 0.0
        %1881 = vmatpush2.msra.mxu0 0.0
        %1882 = vmatprep.subr.mxu0 0.0
        %1883 = vmatpush2.msra.mxu0 0.0
        %1884 = vmatprep.subr.mxu0 0.0
        %1885 = vmatpush2.msra.mxu0 0.0
        %1886 = vmatprep.subr.mxu0 0.0
        %1887 = vmatpush2.msra.mxu0 0.0
        %1888 = vmatprep.subr.mxu0 0.0
        %1889 = vmatpush2.msra.mxu0 0.0
        %1890 = vmatprep.subr.mxu0 0.0
        %1891 = vmatpush2.msra.mxu0 0.0
        %1892 = vmatprep.subr.mxu0 0.0
        %1893 = vmatpush2.msra.mxu0 0.0
        %1894 = vmatprep.subr.mxu0 0.0
        %1895 = vmatpush2.msra.mxu0 0.0
        %1896 = vmatprep.subr.mxu0 0.0
        %1897 = vmatpush2.msra.mxu0 0.0
        %1898 = vmatprep.subr.mxu0 0.0
        %1899 = vmatpush2.msra.mxu0 0.0
        %1900 = vmatprep.mubr.f32.mxu0 0.0
        %1901 = vmatmul.mubr.f32.gmra.mxu0 %v1834
        %v1902 = vpop.f32.mrf.mxu0
        %v1903 = vadd.f32 %v1830, %v1902
        %v1904 = vpop.f32.mrf.mxu0
        %1905 = vdwg.mxu0
        %1906 = vst [vmem:[%s428] sm:$0xff] %v1903
        %s1907 = sand.u32 %s254, 1
        %s1908 = scalar_lea.sflag [#allocation4], %s1907
        %s1909 = sand.u32 %s254, 1
        %s1910 = smul.addr %s1909, 8
        %s1911 = scalar_lea.vmem [#allocation5], %s1910
        // Predicated region
        $region61: #{tpu_custom_call.1} parent=55 // pred_check
          %p1912 = pneg %p264
        $region62: #{tpu_custom_call.1} parent=55 // pred_check_branch
          %1914 = sbr.rel (%p1912) target = $region64
        $region63: #{tpu_custom_call.1} parent=55 // pred_region
          %s1916 = ssub.s32 128, 128
          %1917 = vsyncadd %s1908, %s1916
          %s1918 = smul.addr %s31, 2
          %s1919 = sadd.s32 %s30, %s1918
          %s1920 = smul.addr %s1919, 128
          %s1921 = scalar_lea.hbm %s9, %s1920
          %s1923 = sshll.u32 %s1911, 4
          %s1924 = int_to_ptr.vmem [resolvable:$true] %s1923
          %1926 = dma.vmem_to_hbm [thread:$0]  %s1924, 128, %s1921, %s1908
        $region64: #{tpu_custom_call.1} parent=55 // pred_fallthru
          _
      $region56: #{tpu_custom_call.1} parent=5 // pred_fallthru
        _
      %p1927 = scmp.le.s32.totalorder 2, %s21
      // Predicated region
      $region65: #{tpu_custom_call.1} parent=5 // pred_check
        %p1928 = pneg %p1927
      $region66: #{tpu_custom_call.1} parent=5 // pred_check_branch
        %1930 = sbr.rel (%p1928) target = $region68
      $region67: #{tpu_custom_call.1} parent=5 // pred_region
        %s1931 = ssub.s32 %s21, 2
        // Predicated region
        $region69: #{tpu_custom_call.1} parent=67 // pred_check
          %p1932 = pneg %p270
        $region70: #{tpu_custom_call.1} parent=67 // pred_check_branch
          %1934 = sbr.rel (%p1932) target = $region72
        $region71: #{tpu_custom_call.1} parent=67 // pred_region
          %s1935 = sand.u32 %s255, 1
          %s1936 = scalar_lea.sflag [#allocation4], %s1935
          %s1937 = sand.u32 %s255, 1
          %s1938 = smul.addr %s1937, 8
          %s1939 = scalar_lea.vmem [#allocation5], %s1938
          %1940 = dma.done %s1936, 128
        $region72: #{tpu_custom_call.1} parent=67 // pred_fallthru
          _
      $region68: #{tpu_custom_call.1} parent=5 // pred_fallthru
        _
    $region6: #{tpu_custom_call.1} parent=1 // loop_footer
      %s25 = sadd.s32 1, %s21
    $region7: #{tpu_custom_call.1} parent=1 // loop_footer_branch
      %20 = sbr.rel target = $region3
    $region8: #{tpu_custom_call.1} parent=1 // loop_exit
      _
    %1941 = vsyncpa [#allocation3], 1
    %s1942 = scalar_lea.sflag [#allocation3], 1
    %1943 = vsyncpa %s1942, 1
    %1944 = vsyncpa [#allocation4], 1
    %s1945 = scalar_lea.sflag [#allocation4], 1
    %1946 = vsyncpa %s1945, 1

</llo_original>
